<compile_context>
chip_gen: v7x
topology: tpu7x:2x2x1
jax: 0.10.0
libtpu: 0.0.40
codegen_flags: <defaults>
</compile_context>

<pallas_src>
import functools

import jax
import jax.numpy as jnp
from jax import lax
from jax.experimental import pallas as pl
from jax.experimental.pallas import tpu as pltpu


def _round_up(n: int, m: int) -> int:
    return ((n + m - 1) // m) * m


def _tensorcores_per_chip() -> int:
    """Best-effort TensorCores-per-chip detection (v7x/v4/v5p = 2; v5e/v6e = 1)."""
    try:
        kind = jax.devices()[0].device_kind.lower()
    except Exception:
        return 1
    return 2 if any(tag in kind for tag in ("v7", "v4", "v5p")) else 1


def _self_attn_kernel(x_ref, w_ref, b_ref, gamma_ref, o_ref, *, c, v_rows, cq_pad):
    # x_ref:     (bb, C, HW)  f32 input block (bb batch elements handled in this step)
    # w_ref:     (P_pad, C)   fused projection weights:
    #              rows [0, C)                  : Wv
    #              row  C                       : zero weights (bias 1 -> all-ones row)
    #              rows [C+1, v_rows)           : zero pad
    #              rows [v_rows, v_rows+cq_pad) : Wq / sqrt(Cq), zero-padded
    #              rows [v_rows+cq_pad, P_pad)  : Wk, zero-padded
    # b_ref:     (P_pad, 1)   fused biases (query bias pre-scaled; ones-row bias = 1)
    # gamma_ref: (1,)         residual gain, SMEM
    # o_ref:     (bb, C, HW)  output block
    gamma = gamma_ref[0]
    bb = x_ref.shape[0]

    for b in range(bb):                                     # static unroll, bb in {1, 2}
        x = x_ref[b]                                        # (C, HW)

        # One fused MXU projection for value / ones / query / key (the 1x1 convs).
        fused = jnp.dot(w_ref[...], x, preferred_element_type=jnp.float32) + b_ref[...]
        v_aug = fused[:v_rows]                              # (v_rows, HW); row C is all-ones
        q_t = fused[v_rows:v_rows + cq_pad]                 # (cq_pad, HW), scale folded in
        k_t = fused[v_rows + cq_pad:]                       # (cq_pad, HW)

        # energy^T[j, i] = sum_c k_t[c, j] * q_t[c, i]  == (Q^T K / sqrt(Cq))^T
        # keys land on the sublane axis, queries on the lane axis.
        energy_t = lax.dot_general(k_t, q_t, (((0,), (0,)), ((), ())),
                                   preferred_element_type=jnp.float32)     # (HW, HW)

        # Numerically-stable softmax numerator over the key (sublane) axis, kept
        # UNNORMALIZED; exp + bf16 downcast fused so p_t is the only live big temp.
        m = jnp.max(energy_t, axis=0, keepdims=True)                        # (1, HW)
        p_t = jnp.exp(energy_t - m).astype(jnp.bfloat16)                    # (HW, HW)

        # out_aug[r, i] = sum_j v_aug[r, j] * p_t[j, i] — canonical (m,k)@(k,n) MXU form,
        # bf16 operands, f32 accumulation.  Row C of the result is sum_j p (the softmax
        # denominator) already laid out as a dense (1, HW) row.
        out_aug = jnp.dot(v_aug.astype(jnp.bfloat16), p_t,
                          preferred_element_type=jnp.float32)               # (v_rows, HW)

        # gamma / denominator as a single (1, HW) row (EUP approx reciprocal), then the
        # narrow (C, HW) epilogue: scale + residual.
        scale = gamma * pl.reciprocal(out_aug[c:c + 1], approx=True)        # (1, HW)
        o_ref[b] = (out_aug[:c] * scale + x).astype(o_ref.dtype)


@functools.partial(jax.jit, static_argnames=("batch_block",))
def _self_attention_2d_impl(x_nchw, wq, bq, wk, bk, wv, bv, gamma, *, batch_block):
    B, C, H, W = x_nchw.shape
    HW = H * W
    Cq = wq.shape[1]

    v_rows = _round_up(C + 1, 8)          # value rows + ones row, padded to 8-sublane tile
    cq_pad = _round_up(Cq, 8)             # query/key sections padded to 8-sublane tiles
    P_pad = v_rows + 2 * cq_pad

    x_flat = x_nchw.reshape(B, C, HW)     # pure reshape, no HBM transpose

    inv_sqrt = 1.0 / jnp.sqrt(jnp.float32(Cq))   # fold softmax scale into the query proj

    def pad_rows(w, rows):
        return jnp.pad(w, ((0, rows - w.shape[0]), (0, 0)))

    w_fused = jnp.concatenate([
        wv.T.astype(jnp.float32),                                   # rows [0, C)
        jnp.zeros((v_rows - C, C), jnp.float32),                    # ones row (+pad): zero W
        pad_rows((wq.T * inv_sqrt).astype(jnp.float32), cq_pad),    # query (pre-scaled)
        pad_rows(wk.T.astype(jnp.float32), cq_pad),                 # key
    ], axis=0)                                                      # (P_pad, C)

    b_fused = jnp.concatenate([
        bv.astype(jnp.float32),
        jnp.zeros((v_rows - C,), jnp.float32).at[0].set(1.0),       # ones row via bias = 1
        jnp.pad((bq * inv_sqrt).astype(jnp.float32), (0, cq_pad - Cq)),
        jnp.pad(bk.astype(jnp.float32), (0, cq_pad - Cq)),
    ], axis=0).reshape(P_pad, 1)                                    # (P_pad, 1)

    gamma1 = gamma.reshape(1).astype(jnp.float32)

    bb = batch_block
    kernel = functools.partial(_self_attn_kernel, c=C, v_rows=v_rows, cq_pad=cq_pad)

    out_flat = pl.pallas_call(
        kernel,
        out_shape=jax.ShapeDtypeStruct((B, C, HW), x_nchw.dtype),
        grid_spec=pltpu.PrefetchScalarGridSpec(
            num_scalar_prefetch=0,
            grid=(B // bb,),
            in_specs=[
                pl.BlockSpec((bb, C, HW), lambda i: (i, 0, 0)),      # x slab(s)
                pl.BlockSpec((P_pad, C), lambda i: (0, 0)),          # fused weights (const)
                pl.BlockSpec((P_pad, 1), lambda i: (0, 0)),          # fused biases  (const)
                pl.BlockSpec(memory_space=pltpu.MemorySpace.SMEM),   # gamma scalar
            ],
            out_specs=pl.BlockSpec((bb, C, HW), lambda i: (i, 0, 0)),
        ),
        compiler_params=pltpu.CompilerParams(
            dimension_semantics=("parallel",)),
    )(x_flat, w_fused, b_fused, gamma1)

    return out_flat.reshape(B, C, H, W)


def self_attention_2d(x_nchw, wq, bq, wk, bk, wv, bv, gamma):
    """x_nchw: (B, C, H, W) f32.  1x1-conv weights given as (C_in, C_out) for x @ W."""
    B = x_nchw.shape[0]
    # Single-TC chips (v5e/v6e): collapse the batch grid into one step (removes per-step
    # pipeline overhead).  Multi-TC chips (v7x): keep grid=(B,) 'parallel' so the batch
    # elements shard across TensorCores.
    batch_block = B if _tensorcores_per_chip() == 1 else 1
    return _self_attention_2d_impl(x_nchw, wq, bq, wk, bk, wv, bv, gamma,
                                   batch_block=batch_block)


def _reference(x_nchw, wq, bq, wk, bk, wv, bv, gamma):
    """Pure-JAX f32 reference mirroring the PyTorch forward exactly."""
    B, C, H, W = x_nchw.shape
    HW = H * W
    x_seq = jnp.transpose(x_nchw.reshape(B, C, HW), (0, 2, 1))           # (B, HW, C)
    q = x_seq @ wq + bq                                                  # (B, HW, Cq)
    k = x_seq @ wk + bk
    v = x_seq @ wv + bv
    energy = jnp.einsum("bic,bjc->bij", q, k) / jnp.sqrt(jnp.float32(q.shape[-1]))
    attn = jax.nn.softmax(energy, axis=-1)
    out = jnp.einsum("bij,bjc->bic", attn, v)
    out = gamma.reshape(()) * out + x_seq
    return jnp.transpose(out, (0, 2, 1)).reshape(B, C, H, W)


if __name__ == "__main__":
    key = jax.random.PRNGKey(0)
    B, C, H, W = 2, 16, 16, 16
    Cq = C // 8

    k_x, k_wq, k_bq, k_wk, k_bk, k_wv, k_bv = jax.random.split(key, 7)

    x = jax.random.normal(k_x, (B, C, H, W), dtype=jnp.float32)

    # 1x1 conv weights stored as (C_in, C_out) for x @ W (== Conv2d weight[:, :, 0, 0].T)
    wq = jax.random.normal(k_wq, (C, Cq), dtype=jnp.float32) * 0.1
    bq = jax.random.normal(k_bq, (Cq,), dtype=jnp.float32) * 0.1
    wk = jax.random.normal(k_wk, (C, Cq), dtype=jnp.float32) * 0.1
    bk = jax.random.normal(k_bk, (Cq,), dtype=jnp.float32) * 0.1
    wv = jax.random.normal(k_wv, (C, C), dtype=jnp.float32) * 0.1
    bv = jax.random.normal(k_bv, (C,), dtype=jnp.float32) * 0.1
    # PyTorch __init__ sets gamma=0 (residual-only); nonzero here so the attention
    # path is actually exercised by the check.
    gamma = jnp.array([0.5], dtype=jnp.float32)

    out = self_attention_2d(x, wq, bq, wk, bk, wv, bv, gamma)
    out = jax.block_until_ready(out)

    ref = _reference(x, wq, bq, wk, bk, wv, bv, gamma)
    assert out.shape == (B, C, H, W)
    # Tolerance covers the bf16 MXU inputs on the P@V matmul (numerator and the deferred
    # softmax denominator share the same bf16 roundings, so errors largely cancel) and
    # the EUP approx reciprocal.
    assert jnp.allclose(out, ref, atol=5e-4, rtol=5e-4), "mismatch vs JAX reference"

    print("KERNEL_OK")
</pallas_src>

<mosaic_0001>
module attributes {stable_mosaic.version = 11 : i64} {
  func.func @_self_attn_kernel(%arg0: i32, %arg1: memref<2x16x256xf32, #tpu.memory_space<vmem>>, %arg2: memref<40x16xf32, #tpu.memory_space<vmem>>, %arg3: memref<40x1xf32, #tpu.memory_space<vmem>>, %arg4: memref<1xf32, #tpu.memory_space<smem>>, %arg5: memref<2x16x256xf32, #tpu.memory_space<vmem>>) attributes {dimension_semantics = [#tpu.dimension_semantics<parallel>], iteration_bounds = array<i64: 1>, scalar_prefetch = 0 : i64, scratch_operands = 0 : i64, tpu.core_type = #tpu.core_type<tc>, window_params = [{transform_indices = @transform_0, window_bounds = array<i64: 2, 16, 256>}, {pipeline_mode = #tpu.pipeline_mode<synchronous>, transform_indices = @transform_1, window_bounds = array<i64: 40, 16>}, {pipeline_mode = #tpu.pipeline_mode<synchronous>, transform_indices = @transform_2, window_bounds = array<i64: 40, 1>}, {transform_indices = @transform_3, window_bounds = array<i64: 1>}, {transform_indices = @transform_4, window_bounds = array<i64: 2, 16, 256>}]} {
    %c0 = arith.constant 0 : index
    %0 = memref.load %arg4[%c0] : memref<1xf32, #tpu.memory_space<smem>>
    %c0_0 = arith.constant 0 : index
    %c0_1 = arith.constant 0 : index
    %c0_2 = arith.constant 0 : index
    %1 = vector.load %arg1[%c0_0, %c0_1, %c0_2] : memref<2x16x256xf32, #tpu.memory_space<vmem>>, vector<1x16x256xf32>
    %2 = vector.shape_cast %1 : vector<1x16x256xf32> to vector<16x256xf32>
    %c0_3 = arith.constant 0 : index
    %c0_4 = arith.constant 0 : index
    %3 = vector.load %arg2[%c0_3, %c0_4] : memref<40x16xf32, #tpu.memory_space<vmem>>, vector<40x16xf32>
    %cst = arith.constant dense<0.000000e+00> : vector<40x256xf32>
    %4 = tpu.matmul %3, %2, %cst {dimension_numbers = #tpu.dot_dimension_numbers<[1], [0], [0], [1], [0, 0, 1, 1], [], []>} : vector<40x16xf32>, vector<16x256xf32>, vector<40x256xf32> -> vector<40x256xf32>
    %c0_5 = arith.constant 0 : index
    %c0_6 = arith.constant 0 : index
    %5 = vector.load %arg3[%c0_5, %c0_6] : memref<40x1xf32, #tpu.memory_space<vmem>>, vector<40x1xf32>
    %6 = vector.broadcast %5 : vector<40x1xf32> to vector<40x256xf32>
    %7 = arith.addf %4, %6 : vector<40x256xf32>
    %8 = vector.extract_strided_slice %7 {offsets = [0, 0], sizes = [24, 256], strides = [1, 1]} : vector<40x256xf32> to vector<24x256xf32>
    %9 = vector.extract_strided_slice %7 {offsets = [24, 0], sizes = [8, 256], strides = [1, 1]} : vector<40x256xf32> to vector<8x256xf32>
    %10 = vector.extract_strided_slice %7 {offsets = [32, 0], sizes = [8, 256], strides = [1, 1]} : vector<40x256xf32> to vector<8x256xf32>
    %cst_7 = arith.constant dense<0.000000e+00> : vector<256x256xf32>
    %11 = tpu.matmul %10, %9, %cst_7 {dimension_numbers = #tpu.dot_dimension_numbers<[0], [0], [1], [1], [0, 1, 1, 1], [], []>} : vector<8x256xf32>, vector<8x256xf32>, vector<256x256xf32> -> vector<256x256xf32>
    %cst_8 = arith.constant dense<0xFF800000> : vector<256xf32>
    %12 = vector.multi_reduction <maximumf>, %11, %cst_8 [0] : vector<256x256xf32> to vector<256xf32>
    %13 = vector.shape_cast %12 : vector<256xf32> to vector<1x256xf32>
    %14 = vector.broadcast %13 : vector<1x256xf32> to vector<256x256xf32>
    %15 = arith.subf %11, %14 : vector<256x256xf32>
    %16 = math.exp %15 : vector<256x256xf32>
    %17 = arith.truncf %16 : vector<256x256xf32> to vector<256x256xbf16>
    %18 = arith.truncf %8 : vector<24x256xf32> to vector<24x256xbf16>
    %cst_9 = arith.constant dense<0.000000e+00> : vector<24x256xf32>
    %19 = tpu.matmul %18, %17, %cst_9 {dimension_numbers = #tpu.dot_dimension_numbers<[1], [0], [0], [1], [0, 0, 1, 1], [], []>} : vector<24x256xbf16>, vector<256x256xbf16>, vector<24x256xf32> -> vector<24x256xf32>
    %20 = vector.extract_strided_slice %19 {offsets = [16, 0], sizes = [1, 256], strides = [1, 1]} : vector<24x256xf32> to vector<1x256xf32>
    %21 = tpu.reciprocal %20 {approx = true} : vector<1x256xf32> -> vector<1x256xf32>
    %22 = vector.broadcast %0 : f32 to vector<1x256xf32>
    %23 = arith.mulf %22, %21 : vector<1x256xf32>
    %24 = vector.extract_strided_slice %19 {offsets = [0, 0], sizes = [16, 256], strides = [1, 1]} : vector<24x256xf32> to vector<16x256xf32>
    %25 = vector.broadcast %23 : vector<1x256xf32> to vector<16x256xf32>
    %26 = arith.mulf %24, %25 : vector<16x256xf32>
    %27 = arith.addf %26, %2 : vector<16x256xf32>
    %c0_10 = arith.constant 0 : index
    %c0_11 = arith.constant 0 : index
    %c0_12 = arith.constant 0 : index
    %28 = vector.load %arg5[%c0_10, %c0_11, %c0_12] : memref<2x16x256xf32, #tpu.memory_space<vmem>>, vector<1x16x256xf32>
    %29 = vector.shape_cast %28 : vector<1x16x256xf32> to vector<16x256xf32>
    %30 = vector.shape_cast %27 : vector<16x256xf32> to vector<1x16x256xf32>
    tpu.vector_store %arg5[%c0_10, %c0_11, %c0_12], %30 {strides = array<i32>} : memref<2x16x256xf32, #tpu.memory_space<vmem>>, vector<1x16x256xf32>,
    %c1 = arith.constant 1 : index
    %c0_13 = arith.constant 0 : index
    %c0_14 = arith.constant 0 : index
    %31 = vector.load %arg1[%c1, %c0_13, %c0_14] : memref<2x16x256xf32, #tpu.memory_space<vmem>>, vector<1x16x256xf32>
    %32 = vector.shape_cast %31 : vector<1x16x256xf32> to vector<16x256xf32>
    %c0_15 = arith.constant 0 : index
    %c0_16 = arith.constant 0 : index
    %33 = vector.load %arg2[%c0_15, %c0_16] : memref<40x16xf32, #tpu.memory_space<vmem>>, vector<40x16xf32>
    %cst_17 = arith.constant dense<0.000000e+00> : vector<40x256xf32>
    %34 = tpu.matmul %33, %32, %cst_17 {dimension_numbers = #tpu.dot_dimension_numbers<[1], [0], [0], [1], [0, 0, 1, 1], [], []>} : vector<40x16xf32>, vector<16x256xf32>, vector<40x256xf32> -> vector<40x256xf32>
    %c0_18 = arith.constant 0 : index
    %c0_19 = arith.constant 0 : index
    %35 = vector.load %arg3[%c0_18, %c0_19] : memref<40x1xf32, #tpu.memory_space<vmem>>, vector<40x1xf32>
    %36 = vector.broadcast %35 : vector<40x1xf32> to vector<40x256xf32>
    %37 = arith.addf %34, %36 : vector<40x256xf32>
    %38 = vector.extract_strided_slice %37 {offsets = [0, 0], sizes = [24, 256], strides = [1, 1]} : vector<40x256xf32> to vector<24x256xf32>
    %39 = vector.extract_strided_slice %37 {offsets = [24, 0], sizes = [8, 256], strides = [1, 1]} : vector<40x256xf32> to vector<8x256xf32>
    %40 = vector.extract_strided_slice %37 {offsets = [32, 0], sizes = [8, 256], strides = [1, 1]} : vector<40x256xf32> to vector<8x256xf32>
    %cst_20 = arith.constant dense<0.000000e+00> : vector<256x256xf32>
    %41 = tpu.matmul %40, %39, %cst_20 {dimension_numbers = #tpu.dot_dimension_numbers<[0], [0], [1], [1], [0, 1, 1, 1], [], []>} : vector<8x256xf32>, vector<8x256xf32>, vector<256x256xf32> -> vector<256x256xf32>
    %cst_21 = arith.constant dense<0xFF800000> : vector<256xf32>
    %42 = vector.multi_reduction <maximumf>, %41, %cst_21 [0] : vector<256x256xf32> to vector<256xf32>
    %43 = vector.shape_cast %42 : vector<256xf32> to vector<1x256xf32>
    %44 = vector.broadcast %43 : vector<1x256xf32> to vector<256x256xf32>
    %45 = arith.subf %41, %44 : vector<256x256xf32>
    %46 = math.exp %45 : vector<256x256xf32>
    %47 = arith.truncf %46 : vector<256x256xf32> to vector<256x256xbf16>
    %48 = arith.truncf %38 : vector<24x256xf32> to vector<24x256xbf16>
    %cst_22 = arith.constant dense<0.000000e+00> : vector<24x256xf32>
    %49 = tpu.matmul %48, %47, %cst_22 {dimension_numbers = #tpu.dot_dimension_numbers<[1], [0], [0], [1], [0, 0, 1, 1], [], []>} : vector<24x256xbf16>, vector<256x256xbf16>, vector<24x256xf32> -> vector<24x256xf32>
    %50 = vector.extract_strided_slice %49 {offsets = [16, 0], sizes = [1, 256], strides = [1, 1]} : vector<24x256xf32> to vector<1x256xf32>
    %51 = tpu.reciprocal %50 {approx = true} : vector<1x256xf32> -> vector<1x256xf32>
    %52 = vector.broadcast %0 : f32 to vector<1x256xf32>
    %53 = arith.mulf %52, %51 : vector<1x256xf32>
    %54 = vector.extract_strided_slice %49 {offsets = [0, 0], sizes = [16, 256], strides = [1, 1]} : vector<24x256xf32> to vector<16x256xf32>
    %55 = vector.broadcast %53 : vector<1x256xf32> to vector<16x256xf32>
    %56 = arith.mulf %54, %55 : vector<16x256xf32>
    %57 = arith.addf %56, %32 : vector<16x256xf32>
    %c1_23 = arith.constant 1 : index
    %c0_24 = arith.constant 0 : index
    %c0_25 = arith.constant 0 : index
    %58 = vector.load %arg5[%c1_23, %c0_24, %c0_25] : memref<2x16x256xf32, #tpu.memory_space<vmem>>, vector<1x16x256xf32>
    %59 = vector.shape_cast %58 : vector<1x16x256xf32> to vector<16x256xf32>
    %60 = vector.shape_cast %57 : vector<16x256xf32> to vector<1x16x256xf32>
    tpu.vector_store %arg5[%c1_23, %c0_24, %c0_25], %60 {strides = array<i32>} : memref<2x16x256xf32, #tpu.memory_space<vmem>>, vector<1x16x256xf32>,
    return
  }
  func.func @transform_0(%arg0: i32) -> (i32, i32, i32) {
    %c0_i32 = arith.constant 0 : i32
    %c0_i32_0 = arith.constant 0 : i32
    %c0_i32_1 = arith.constant 0 : i32
    return %arg0, %c0_i32, %c0_i32_0 : i32, i32, i32
  }
  func.func @transform_1(%arg0: i32) -> (i32, i32) {
    %c0_i32 = arith.constant 0 : i32
    %c0_i32_0 = arith.constant 0 : i32
    %c0_i32_1 = arith.constant 0 : i32
    return %c0_i32, %c0_i32_0 : i32, i32
  }
  func.func @transform_2(%arg0: i32) -> (i32, i32) {
    %c0_i32 = arith.constant 0 : i32
    %c0_i32_0 = arith.constant 0 : i32
    %c0_i32_1 = arith.constant 0 : i32
    return %c0_i32, %c0_i32_0 : i32, i32
  }
  func.func @transform_3(%arg0: i32) -> i32 {
    %c0_i32 = arith.constant 0 : i32
    %c0_i32_0 = arith.constant 0 : i32
    return %c0_i32 : i32
  }
  func.func @transform_4(%arg0: i32) -> (i32, i32, i32) {
    %c0_i32 = arith.constant 0 : i32
    %c0_i32_0 = arith.constant 0 : i32
    %c0_i32_1 = arith.constant 0 : i32
    return %arg0, %c0_i32, %c0_i32_0 : i32, i32, i32
  }
}

</mosaic_0001>

<llo_original>
// kernel: _self_attention_2d_impl.1
$region0: #{_self_attention_2d_impl.1}
  #allocation0 [shape = 'u32[]', space=smem, size = 0x4, offset = 0x4, fixed_abs, tag = 'smem constant byte address 0x4 - core index']
  #allocation1 [shape = 'u32[144,128]{1,0:T(1,128)}', space=vmem, size = 0x12000, scoped, tag = 'internal scratch']
  #allocation2 [shape = 'f32[1]{0:T(128)S(6)}', space=smem, size = 0x200, scoped, tag = 'scoped memory for _self_attention_2d_impl.1']
  %s0 = inlined_call_operand.vmem [shape: f32[2,16,256], index: 0, kind: input, shape index: {}]
  %s1 = inlined_call_operand.vmem [shape: f32[40,16], index: 1, kind: input, shape index: {}]
  %s2 = inlined_call_operand.vmem [shape: f32[40,1], index: 2, kind: input, shape index: {}]
  %s3 = inlined_call_operand.<no memory space> [shape: f32[1], index: 3, kind: input, shape index: {}]
  %s4 = inlined_call_operand.vmem [shape: f32[2,16,256], index: 4, kind: output, shape index: {}]
  %s5 = sld [smem:[#allocation0]]
  $region26: #{_self_attention_2d_impl.1} parent=0
    _
  %s7 = ssub.s32 1, %s5
  %s8 = scalar_select 0, %s7, %s5
  %9 = sst [smem:[#allocation2]] %s3
  // Predicated region
  $region2: #{_self_attention_2d_impl.1} parent=0 // pred_check
    _
  $region3: #{_self_attention_2d_impl.1} parent=0 // pred_check_branch
    %11 = sbr.rel (0) target = $region5
  $region4: #{_self_attention_2d_impl.1} parent=0 // pred_region
    _
  $region5: #{_self_attention_2d_impl.1} parent=0 // pred_fallthru
    _
  // Predicated region
  $region6: #{_self_attention_2d_impl.1} parent=0 // pred_check
    _
  $region7: #{_self_attention_2d_impl.1} parent=0 // pred_check_branch
    %13 = sbr.rel (0) target = $region9
  $region8: #{_self_attention_2d_impl.1} parent=0 // pred_region
    _
  $region9: #{_self_attention_2d_impl.1} parent=0 // pred_fallthru
    _
  // Predicated region
  $region10: #{_self_attention_2d_impl.1} parent=0 // pred_check
    _
  $region11: #{_self_attention_2d_impl.1} parent=0 // pred_check_branch
    %15 = sbr.rel (0) target = $region13
  $region12: #{_self_attention_2d_impl.1} parent=0 // pred_region
    _
  $region13: #{_self_attention_2d_impl.1} parent=0 // pred_fallthru
    _
  // Predicated region
  $region14: #{_self_attention_2d_impl.1} parent=0 // pred_check
    _
  $region15: #{_self_attention_2d_impl.1} parent=0 // pred_check_branch
    %17 = sbr.rel (0) target = $region17
  $region16: #{_self_attention_2d_impl.1} parent=0 // pred_region
    _
  $region17: #{_self_attention_2d_impl.1} parent=0 // pred_fallthru
    _
  %s18 = sld [smem:[#allocation2]]
  %v19 = vld [vmem:[%s0] sm:$0xff]
  %v20 = vld [vmem:[%s0 + $0x8] sm:$0xff]
  %v21 = vld [vmem:[%s0 + $0x10] sm:$0xff]
  %v22 = vld [vmem:[%s0 + $0x18] sm:$0xff]
  %v23 = vld [vmem:[%s1] sm:$0xff]
  %v24 = vld [vmem:[%s1 + $0x8] sm:$0xff]
  %v25 = vld [vmem:[%s1 + $0x10] sm:$0xff]
  %v26 = vld [vmem:[%s1 + $0x18] sm:$0xff]
  %v27 = vld [vmem:[%s1 + $0x20] sm:$0xff]
  %v28 = vld [vmem:[%s2] sm:$0xff]
  %v29 = vld [vmem:[%s2 + $0x8] sm:$0xff]
  %v30 = vld [vmem:[%s2 + $0x10] sm:$0xff]
  %v31 = vld [vmem:[%s2 + $0x18] sm:$0xff]
  %v32 = vld [vmem:[%s2 + $0x20] sm:$0xff]
  %34 = vset.pattern.permute.xlu0 0
  %35 = vperm.xlu0 %34, %v28
  %v36 = vpop.permute.xlu0 %35
  %39 = vset.pattern.permute.xlu0 0
  %40 = vperm.xlu0 %39, %v29
  %v41 = vpop.permute.xlu0 %40
  %44 = vset.pattern.permute.xlu0 0
  %45 = vperm.xlu0 %44, %v30
  %v46 = vpop.permute.xlu0 %45
  %49 = vset.pattern.permute.xlu0 0
  %50 = vperm.xlu0 %49, %v31
  %v51 = vpop.permute.xlu0 %50
  %54 = vset.pattern.permute.xlu0 0
  %55 = vperm.xlu0 %54, %v32
  %v56 = vpop.permute.xlu0 %55
  %vm58 = vcmask 130048
  %v60 = vsel %vm58, %v23, 0
  %v63 = vsel %vm58, %v24, 0
  %v66 = vsel %vm58, %v25, 0
  %v69 = vsel %vm58, %v26, 0
  %v72 = vsel %vm58, %v27, 0
  %74 = vmatprep.subr.mxu0 %v20
  %75 = vmatpush1.msra.mxu0 %v19
  %76 = vmatprep.subr.mxu0 %v22
  %77 = vmatpush1.msra.mxu0 %v21
  %78 = vmatprep.subr.mxu0 0.0
  %79 = vmatpush1.msra.mxu0 0.0
  %80 = vmatprep.subr.mxu0 0.0
  %81 = vmatpush1.msra.mxu0 0.0
  %82 = vmatprep.subr.mxu0 0.0
  %83 = vmatpush1.msra.mxu0 0.0
  %84 = vmatprep.subr.mxu0 0.0
  %85 = vmatpush1.msra.mxu0 0.0
  %86 = vmatprep.subr.mxu0 0.0
  %87 = vmatpush1.msra.mxu0 0.0
  %88 = vmatprep.subr.mxu0 0.0
  %89 = vmatpush1.msra.mxu0 0.0
  %90 = vmatprep.subr.mxu0 0.0
  %91 = vmatpush1.msra.mxu0 0.0
  %92 = vmatprep.subr.mxu0 0.0
  %93 = vmatpush1.msra.mxu0 0.0
  %94 = vmatprep.subr.mxu0 0.0
  %95 = vmatpush1.msra.mxu0 0.0
  %96 = vmatprep.subr.mxu0 0.0
  %97 = vmatpush1.msra.mxu0 0.0
  %98 = vmatprep.subr.mxu0 0.0
  %99 = vmatpush1.msra.mxu0 0.0
  %100 = vmatprep.subr.mxu0 0.0
  %101 = vmatpush1.msra.mxu0 0.0
  %102 = vmatprep.subr.mxu0 0.0
  %103 = vmatpush1.msra.mxu0 0.0
  %104 = vmatprep.subr.mxu0 0.0
  %105 = vmatpush1.msra.mxu0 0.0
  %106 = vmatprep.subr.mxu0 0.0
  %107 = vmatpush1.msra.mxu0 0.0
  %108 = vmatprep.subr.mxu0 0.0
  %109 = vmatpush1.msra.mxu0 0.0
  %110 = vmatprep.subr.mxu0 0.0
  %111 = vmatpush1.msra.mxu0 0.0
  %112 = vmatprep.subr.mxu0 0.0
  %113 = vmatpush1.msra.mxu0 0.0
  %114 = vmatprep.subr.mxu0 0.0
  %115 = vmatpush1.msra.mxu0 0.0
  %116 = vmatprep.subr.mxu0 0.0
  %117 = vmatpush1.msra.mxu0 0.0
  %118 = vmatprep.subr.mxu0 0.0
  %119 = vmatpush1.msra.mxu0 0.0
  %120 = vmatprep.subr.mxu0 0.0
  %121 = vmatpush1.msra.mxu0 0.0
  %122 = vmatprep.subr.mxu0 0.0
  %123 = vmatpush1.msra.mxu0 0.0
  %124 = vmatprep.subr.mxu0 0.0
  %125 = vmatpush1.msra.mxu0 0.0
  %126 = vmatprep.subr.mxu0 0.0
  %127 = vmatpush1.msra.mxu0 0.0
  %128 = vmatprep.subr.mxu0 0.0
  %129 = vmatpush1.msra.mxu0 0.0
  %130 = vmatprep.subr.mxu0 0.0
  %131 = vmatpush1.msra.mxu0 0.0
  %132 = vmatprep.subr.mxu0 0.0
  %133 = vmatpush1.msra.mxu0 0.0
  %134 = vmatprep.subr.mxu0 0.0
  %135 = vmatpush1.msra.mxu0 0.0
  %136 = vmatprep.subr.mxu0 0.0
  %137 = vmatpush1.msra.mxu0 0.0
  %138 = vmatprep.mubr.f32.mxu0 0.0
  %139 = vmatmul.mubr.f32.gmra.mrb[0].mxu0 %v60
  %v140 = vpop.f32.mrb[0].mxu0
  %v141 = vadd.f32 %v36, %v140
  %v142 = vpop.f32.mrb[0].mxu0
  %v143 = vadd.f32 %v36, %v142
  %144 = vmatprep.mubr.f32.mxu0 0.0
  %145 = vmatmul.mubr.f32.gmra.mrb[0].mxu0 %v63
  %v146 = vpop.f32.mrb[0].mxu0
  %v147 = vadd.f32 %v41, %v146
  %v148 = vpop.f32.mrb[0].mxu0
  %v149 = vadd.f32 %v41, %v148
  %150 = vmatprep.mubr.f32.mxu0 0.0
  %151 = vmatmul.mubr.f32.gmra.mrb[0].mxu0 %v66
  %v152 = vpop.f32.mrb[0].mxu0
  %v153 = vadd.f32 %v46, %v152
  %v154 = vpop.f32.mrb[0].mxu0
  %v155 = vadd.f32 %v46, %v154
  %156 = vmatprep.mubr.f32.mxu0 0.0
  %157 = vmatmul.mubr.f32.gmra.mrb[0].mxu0 %v69
  %v158 = vpop.f32.mrb[0].mxu0
  %v159 = vadd.f32 %v51, %v158
  %v160 = vpop.f32.mrb[0].mxu0
  %v161 = vadd.f32 %v51, %v160
  %162 = vmatprep.mubr.f32.mxu0 0.0
  %163 = vmatmul.mubr.f32.gmra.mrb[0].mxu0 %v72
  %v164 = vpop.f32.mrb[0].mxu0
  %v165 = vadd.f32 %v56, %v164
  %v166 = vpop.f32.mrb[0].mxu0
  %v167 = vadd.f32 %v56, %v166
  %168 = vdwg.mxu0
  %169 = vxpose.xlu0.b32.start [1/16] %v165, 128
  %170 = vxpose.xlu0.b32.cont [2/16] 0.0, 128
  %171 = vxpose.xlu0.b32.cont [3/16] 0.0, 128
  %172 = vxpose.xlu0.b32.cont [4/16] 0.0, 128
  %173 = vxpose.xlu0.b32.cont [5/16] 0.0, 128
  %174 = vxpose.xlu0.b32.cont [6/16] 0.0, 128
  %175 = vxpose.xlu0.b32.cont [7/16] 0.0, 128
  %176 = vxpose.xlu0.b32.cont [8/16] 0.0, 128
  %177 = vxpose.xlu0.b32.cont [9/16] 0.0, 128
  %178 = vxpose.xlu0.b32.cont [10/16] 0.0, 128
  %179 = vxpose.xlu0.b32.cont [11/16] 0.0, 128
  %180 = vxpose.xlu0.b32.cont [12/16] 0.0, 128
  %181 = vxpose.xlu0.b32.cont [13/16] 0.0, 128
  %182 = vxpose.xlu0.b32.cont [14/16] 0.0, 128
  %183 = vxpose.xlu0.b32.cont [15/16] 0.0, 128
  %184 = vxpose.xlu0.b32.end [16/16] 0.0, 128
  %v185 = vpop.trf.xlu0
  %v186 = vpop.trf.xlu0
  %v187 = vpop.trf.xlu0
  %v188 = vpop.trf.xlu0
  %v189 = vpop.trf.xlu0
  %v190 = vpop.trf.xlu0
  %v191 = vpop.trf.xlu0
  %v192 = vpop.trf.xlu0
  %v193 = vpop.trf.xlu0
  %v194 = vpop.trf.xlu0
  %v195 = vpop.trf.xlu0
  %v196 = vpop.trf.xlu0
  %v197 = vpop.trf.xlu0
  %v198 = vpop.trf.xlu0
  %v199 = vpop.trf.xlu0
  %v200 = vpop.trf.xlu0
  %201 = vxpose.xlu0.b32.start [1/16] %v167, 128
  %202 = vxpose.xlu0.b32.cont [2/16] 0.0, 128
  %203 = vxpose.xlu0.b32.cont [3/16] 0.0, 128
  %204 = vxpose.xlu0.b32.cont [4/16] 0.0, 128
  %205 = vxpose.xlu0.b32.cont [5/16] 0.0, 128
  %206 = vxpose.xlu0.b32.cont [6/16] 0.0, 128
  %207 = vxpose.xlu0.b32.cont [7/16] 0.0, 128
  %208 = vxpose.xlu0.b32.cont [8/16] 0.0, 128
  %209 = vxpose.xlu0.b32.cont [9/16] 0.0, 128
  %210 = vxpose.xlu0.b32.cont [10/16] 0.0, 128
  %211 = vxpose.xlu0.b32.cont [11/16] 0.0, 128
  %212 = vxpose.xlu0.b32.cont [12/16] 0.0, 128
  %213 = vxpose.xlu0.b32.cont [13/16] 0.0, 128
  %214 = vxpose.xlu0.b32.cont [14/16] 0.0, 128
  %215 = vxpose.xlu0.b32.cont [15/16] 0.0, 128
  %216 = vxpose.xlu0.b32.end [16/16] 0.0, 128
  %v217 = vpop.trf.xlu0
  %v218 = vpop.trf.xlu0
  %v219 = vpop.trf.xlu0
  %v220 = vpop.trf.xlu0
  %v221 = vpop.trf.xlu0
  %v222 = vpop.trf.xlu0
  %v223 = vpop.trf.xlu0
  %v224 = vpop.trf.xlu0
  %v225 = vpop.trf.xlu0
  %v226 = vpop.trf.xlu0
  %v227 = vpop.trf.xlu0
  %v228 = vpop.trf.xlu0
  %v229 = vpop.trf.xlu0
  %v230 = vpop.trf.xlu0
  %v231 = vpop.trf.xlu0
  %v232 = vpop.trf.xlu0
  %vm233 = vcmask 64512
  %v235 = vsel %vm233, %v185, 0
  %v238 = vsel %vm233, %v186, 0
  %v241 = vsel %vm233, %v187, 0
  %v244 = vsel %vm233, %v188, 0
  %v247 = vsel %vm233, %v189, 0
  %v250 = vsel %vm233, %v190, 0
  %v253 = vsel %vm233, %v191, 0
  %v256 = vsel %vm233, %v192, 0
  %v259 = vsel %vm233, %v193, 0
  %v262 = vsel %vm233, %v194, 0
  %v265 = vsel %vm233, %v195, 0
  %v268 = vsel %vm233, %v196, 0
  %v271 = vsel %vm233, %v197, 0
  %v274 = vsel %vm233, %v198, 0
  %v277 = vsel %vm233, %v199, 0
  %v280 = vsel %vm233, %v200, 0
  %v283 = vsel %vm233, %v217, 0
  %v286 = vsel %vm233, %v218, 0
  %v289 = vsel %vm233, %v219, 0
  %v292 = vsel %vm233, %v220, 0
  %v295 = vsel %vm233, %v221, 0
  %v298 = vsel %vm233, %v222, 0
  %v301 = vsel %vm233, %v223, 0
  %v304 = vsel %vm233, %v224, 0
  %v307 = vsel %vm233, %v225, 0
  %v310 = vsel %vm233, %v226, 0
  %v313 = vsel %vm233, %v227, 0
  %v316 = vsel %vm233, %v228, 0
  %v319 = vsel %vm233, %v229, 0
  %v322 = vsel %vm233, %v230, 0
  %v325 = vsel %vm233, %v231, 0
  %v328 = vsel %vm233, %v232, 0
  %330 = vmatprep.subr.mxu0 %v161
  %331 = vmatpush1.msra.mxu0 %v159
  %332 = vmatprep.subr.mxu0 0.0
  %333 = vmatpush1.msra.mxu0 0.0
  %334 = vmatprep.subr.mxu0 0.0
  %335 = vmatpush1.msra.mxu0 0.0
  %336 = vmatprep.subr.mxu0 0.0
  %337 = vmatpush1.msra.mxu0 0.0
  %338 = vmatprep.subr.mxu0 0.0
  %339 = vmatpush1.msra.mxu0 0.0
  %340 = vmatprep.subr.mxu0 0.0
  %341 = vmatpush1.msra.mxu0 0.0
  %342 = vmatprep.subr.mxu0 0.0
  %343 = vmatpush1.msra.mxu0 0.0
  %344 = vmatprep.subr.mxu0 0.0
  %345 = vmatpush1.msra.mxu0 0.0
  %346 = vmatprep.subr.mxu0 0.0
  %347 = vmatpush1.msra.mxu0 0.0
  %348 = vmatprep.subr.mxu0 0.0
  %349 = vmatpush1.msra.mxu0 0.0
  %350 = vmatprep.subr.mxu0 0.0
  %351 = vmatpush1.msra.mxu0 0.0
  %352 = vmatprep.subr.mxu0 0.0
  %353 = vmatpush1.msra.mxu0 0.0
  %354 = vmatprep.subr.mxu0 0.0
  %355 = vmatpush1.msra.mxu0 0.0
  %356 = vmatprep.subr.mxu0 0.0
  %357 = vmatpush1.msra.mxu0 0.0
  %358 = vmatprep.subr.mxu0 0.0
  %359 = vmatpush1.msra.mxu0 0.0
  %360 = vmatprep.subr.mxu0 0.0
  %361 = vmatpush1.msra.mxu0 0.0
  %362 = vmatprep.subr.mxu0 0.0
  %363 = vmatpush1.msra.mxu0 0.0
  %364 = vmatprep.subr.mxu0 0.0
  %365 = vmatpush1.msra.mxu0 0.0
  %366 = vmatprep.subr.mxu0 0.0
  %367 = vmatpush1.msra.mxu0 0.0
  %368 = vmatprep.subr.mxu0 0.0
  %369 = vmatpush1.msra.mxu0 0.0
  %370 = vmatprep.subr.mxu0 0.0
  %371 = vmatpush1.msra.mxu0 0.0
  %372 = vmatprep.subr.mxu0 0.0
  %373 = vmatpush1.msra.mxu0 0.0
  %374 = vmatprep.subr.mxu0 0.0
  %375 = vmatpush1.msra.mxu0 0.0
  %376 = vmatprep.subr.mxu0 0.0
  %377 = vmatpush1.msra.mxu0 0.0
  %378 = vmatprep.subr.mxu0 0.0
  %379 = vmatpush1.msra.mxu0 0.0
  %380 = vmatprep.subr.mxu0 0.0
  %381 = vmatpush1.msra.mxu0 0.0
  %382 = vmatprep.subr.mxu0 0.0
  %383 = vmatpush1.msra.mxu0 0.0
  %384 = vmatprep.subr.mxu0 0.0
  %385 = vmatpush1.msra.mxu0 0.0
  %386 = vmatprep.subr.mxu0 0.0
  %387 = vmatpush1.msra.mxu0 0.0
  %388 = vmatprep.subr.mxu0 0.0
  %389 = vmatpush1.msra.mxu0 0.0
  %390 = vmatprep.subr.mxu0 0.0
  %391 = vmatpush1.msra.mxu0 0.0
  %392 = vmatprep.subr.mxu0 0.0
  %393 = vmatpush1.msra.mxu0 0.0
  %394 = vmatprep.mubr.f32.mxu0 0.0
  %395 = vmatmul.mubr.f32.gmra.mrb[0].mxu0 %v235
  %v396 = vpop.f32.mrb[0].mxu0
  %v397 = vadd.f32 0.0, %v396
  %v398 = vpop.f32.mrb[0].mxu0
  %v399 = vadd.f32 0.0, %v398
  %400 = vmatprep.mubr.f32.mxu0 0.0
  %401 = vmatmul.mubr.f32.gmra.mrb[0].mxu0 %v238
  %v402 = vpop.f32.mrb[0].mxu0
  %v403 = vadd.f32 0.0, %v402
  %v404 = vpop.f32.mrb[0].mxu0
  %v405 = vadd.f32 0.0, %v404
  %406 = vmatprep.mubr.f32.mxu0 0.0
  %407 = vmatmul.mubr.f32.gmra.mrb[0].mxu0 %v241
  %v408 = vpop.f32.mrb[0].mxu0
  %v409 = vadd.f32 0.0, %v408
  %v410 = vpop.f32.mrb[0].mxu0
  %v411 = vadd.f32 0.0, %v410
  %412 = vmatprep.mubr.f32.mxu0 0.0
  %413 = vmatmul.mubr.f32.gmra.mrb[0].mxu0 %v244
  %v414 = vpop.f32.mrb[0].mxu0
  %v415 = vadd.f32 0.0, %v414
  %v416 = vpop.f32.mrb[0].mxu0
  %v417 = vadd.f32 0.0, %v416
  %418 = vmatprep.mubr.f32.mxu0 0.0
  %419 = vmatmul.mubr.f32.gmra.mrb[0].mxu0 %v247
  %v420 = vpop.f32.mrb[0].mxu0
  %v421 = vadd.f32 0.0, %v420
  %v422 = vpop.f32.mrb[0].mxu0
  %v423 = vadd.f32 0.0, %v422
  %424 = vmatprep.mubr.f32.mxu0 0.0
  %425 = vmatmul.mubr.f32.gmra.mrb[0].mxu0 %v250
  %v426 = vpop.f32.mrb[0].mxu0
  %v427 = vadd.f32 0.0, %v426
  %v428 = vpop.f32.mrb[0].mxu0
  %v429 = vadd.f32 0.0, %v428
  %430 = vmatprep.mubr.f32.mxu0 0.0
  %431 = vmatmul.mubr.f32.gmra.mrb[0].mxu0 %v253
  %v432 = vpop.f32.mrb[0].mxu0
  %v433 = vadd.f32 0.0, %v432
  %v434 = vpop.f32.mrb[0].mxu0
  %v435 = vadd.f32 0.0, %v434
  %436 = vmatprep.mubr.f32.mxu0 0.0
  %437 = vmatmul.mubr.f32.gmra.mrb[0].mxu0 %v256
  %v438 = vpop.f32.mrb[0].mxu0
  %v439 = vadd.f32 0.0, %v438
  %v440 = vpop.f32.mrb[0].mxu0
  %v441 = vadd.f32 0.0, %v440
  %442 = vmatprep.mubr.f32.mxu0 0.0
  %443 = vmatmul.mubr.f32.gmra.mrb[0].mxu0 %v259
  %v444 = vpop.f32.mrb[0].mxu0
  %v445 = vadd.f32 0.0, %v444
  %v446 = vpop.f32.mrb[0].mxu0
  %v447 = vadd.f32 0.0, %v446
  %448 = vmatprep.mubr.f32.mxu0 0.0
  %449 = vmatmul.mubr.f32.gmra.mrb[0].mxu0 %v262
  %v450 = vpop.f32.mrb[0].mxu0
  %v451 = vadd.f32 0.0, %v450
  %v452 = vpop.f32.mrb[0].mxu0
  %v453 = vadd.f32 0.0, %v452
  %454 = vmatprep.mubr.f32.mxu0 0.0
  %455 = vmatmul.mubr.f32.gmra.mrb[0].mxu0 %v265
  %v456 = vpop.f32.mrb[0].mxu0
  %v457 = vadd.f32 0.0, %v456
  %v458 = vpop.f32.mrb[0].mxu0
  %v459 = vadd.f32 0.0, %v458
  %460 = vmatprep.mubr.f32.mxu0 0.0
  %461 = vmatmul.mubr.f32.gmra.mrb[0].mxu0 %v268
  %v462 = vpop.f32.mrb[0].mxu0
  %v463 = vadd.f32 0.0, %v462
  %v464 = vpop.f32.mrb[0].mxu0
  %v465 = vadd.f32 0.0, %v464
  %466 = vmatprep.mubr.f32.mxu0 0.0
  %467 = vmatmul.mubr.f32.gmra.mrb[0].mxu0 %v271
  %v468 = vpop.f32.mrb[0].mxu0
  %v469 = vadd.f32 0.0, %v468
  %v470 = vpop.f32.mrb[0].mxu0
  %v471 = vadd.f32 0.0, %v470
  %472 = vmatprep.mubr.f32.mxu0 0.0
  %473 = vmatmul.mubr.f32.gmra.mrb[0].mxu0 %v274
  %v474 = vpop.f32.mrb[0].mxu0
  %v475 = vadd.f32 0.0, %v474
  %v476 = vpop.f32.mrb[0].mxu0
  %v477 = vadd.f32 0.0, %v476
  %478 = vmatprep.mubr.f32.mxu0 0.0
  %479 = vmatmul.mubr.f32.gmra.mrb[0].mxu0 %v277
  %v480 = vpop.f32.mrb[0].mxu0
  %v481 = vadd.f32 0.0, %v480
  %v482 = vpop.f32.mrb[0].mxu0
  %v483 = vadd.f32 0.0, %v482
  %484 = vmatprep.mubr.f32.mxu0 0.0
  %485 = vmatmul.mubr.f32.gmra.mrb[0].mxu0 %v280
  %v486 = vpop.f32.mrb[0].mxu0
  %v487 = vadd.f32 0.0, %v486
  %v488 = vpop.f32.mrb[0].mxu0
  %v489 = vadd.f32 0.0, %v488
  %490 = vmatprep.mubr.f32.mxu0 0.0
  %491 = vmatmul.mubr.f32.gmra.mrb[0].mxu0 %v283
  %v492 = vpop.f32.mrb[0].mxu0
  %v493 = vadd.f32 0.0, %v492
  %v494 = vpop.f32.mrb[0].mxu0
  %v495 = vadd.f32 0.0, %v494
  %496 = vmatprep.mubr.f32.mxu0 0.0
  %497 = vmatmul.mubr.f32.gmra.mrb[0].mxu0 %v286
  %v498 = vpop.f32.mrb[0].mxu0
  %v499 = vadd.f32 0.0, %v498
  %v500 = vpop.f32.mrb[0].mxu0
  %v501 = vadd.f32 0.0, %v500
  %502 = vmatprep.mubr.f32.mxu0 0.0
  %503 = vmatmul.mubr.f32.gmra.mrb[0].mxu0 %v289
  %v504 = vpop.f32.mrb[0].mxu0
  %v505 = vadd.f32 0.0, %v504
  %v506 = vpop.f32.mrb[0].mxu0
  %v507 = vadd.f32 0.0, %v506
  %508 = vmatprep.mubr.f32.mxu0 0.0
  %509 = vmatmul.mubr.f32.gmra.mrb[0].mxu0 %v292
  %v510 = vpop.f32.mrb[0].mxu0
  %v511 = vadd.f32 0.0, %v510
  %v512 = vpop.f32.mrb[0].mxu0
  %v513 = vadd.f32 0.0, %v512
  %514 = vmatprep.mubr.f32.mxu0 0.0
  %515 = vmatmul.mubr.f32.gmra.mrb[0].mxu0 %v295
  %v516 = vpop.f32.mrb[0].mxu0
  %v517 = vadd.f32 0.0, %v516
  %v518 = vpop.f32.mrb[0].mxu0
  %v519 = vadd.f32 0.0, %v518
  %520 = vmatprep.mubr.f32.mxu0 0.0
  %521 = vmatmul.mubr.f32.gmra.mrb[0].mxu0 %v298
  %v522 = vpop.f32.mrb[0].mxu0
  %v523 = vadd.f32 0.0, %v522
  %v524 = vpop.f32.mrb[0].mxu0
  %v525 = vadd.f32 0.0, %v524
  %526 = vmatprep.mubr.f32.mxu0 0.0
  %527 = vmatmul.mubr.f32.gmra.mrb[0].mxu0 %v301
  %v528 = vpop.f32.mrb[0].mxu0
  %v529 = vadd.f32 0.0, %v528
  %v530 = vpop.f32.mrb[0].mxu0
  %v531 = vadd.f32 0.0, %v530
  %532 = vmatprep.mubr.f32.mxu0 0.0
  %533 = vmatmul.mubr.f32.gmra.mrb[0].mxu0 %v304
  %v534 = vpop.f32.mrb[0].mxu0
  %v535 = vadd.f32 0.0, %v534
  %v536 = vpop.f32.mrb[0].mxu0
  %v537 = vadd.f32 0.0, %v536
  %538 = vmatprep.mubr.f32.mxu0 0.0
  %539 = vmatmul.mubr.f32.gmra.mrb[0].mxu0 %v307
  %v540 = vpop.f32.mrb[0].mxu0
  %v541 = vadd.f32 0.0, %v540
  %v542 = vpop.f32.mrb[0].mxu0
  %v543 = vadd.f32 0.0, %v542
  %544 = vmatprep.mubr.f32.mxu0 0.0
  %545 = vmatmul.mubr.f32.gmra.mrb[0].mxu0 %v310
  %v546 = vpop.f32.mrb[0].mxu0
  %v547 = vadd.f32 0.0, %v546
  %v548 = vpop.f32.mrb[0].mxu0
  %v549 = vadd.f32 0.0, %v548
  %550 = vmatprep.mubr.f32.mxu0 0.0
  %551 = vmatmul.mubr.f32.gmra.mrb[0].mxu0 %v313
  %v552 = vpop.f32.mrb[0].mxu0
  %v553 = vadd.f32 0.0, %v552
  %v554 = vpop.f32.mrb[0].mxu0
  %v555 = vadd.f32 0.0, %v554
  %556 = vmatprep.mubr.f32.mxu0 0.0
  %557 = vmatmul.mubr.f32.gmra.mrb[0].mxu0 %v316
  %v558 = vpop.f32.mrb[0].mxu0
  %v559 = vadd.f32 0.0, %v558
  %v560 = vpop.f32.mrb[0].mxu0
  %v561 = vadd.f32 0.0, %v560
  %562 = vmatprep.mubr.f32.mxu0 0.0
  %563 = vmatmul.mubr.f32.gmra.mrb[0].mxu0 %v319
  %v564 = vpop.f32.mrb[0].mxu0
  %v565 = vadd.f32 0.0, %v564
  %v566 = vpop.f32.mrb[0].mxu0
  %v567 = vadd.f32 0.0, %v566
  %568 = vmatprep.mubr.f32.mxu0 0.0
  %569 = vmatmul.mubr.f32.gmra.mrb[0].mxu0 %v322
  %v570 = vpop.f32.mrb[0].mxu0
  %v571 = vadd.f32 0.0, %v570
  %v572 = vpop.f32.mrb[0].mxu0
  %v573 = vadd.f32 0.0, %v572
  %574 = vmatprep.mubr.f32.mxu0 0.0
  %575 = vmatmul.mubr.f32.gmra.mrb[0].mxu0 %v325
  %v576 = vpop.f32.mrb[0].mxu0
  %v577 = vadd.f32 0.0, %v576
  %v578 = vpop.f32.mrb[0].mxu0
  %v579 = vadd.f32 0.0, %v578
  %580 = vmatprep.mubr.f32.mxu0 0.0
  %581 = vmatmul.mubr.f32.gmra.mrb[0].mxu0 %v328
  %v582 = vpop.f32.mrb[0].mxu0
  %v583 = vadd.f32 0.0, %v582
  %v584 = vpop.f32.mrb[0].mxu0
  %v585 = vadd.f32 0.0, %v584
  %586 = vdwg.mxu0
  %v587 = vmax.f32 %v397, %v409
  %v588 = vmax.f32 %v403, %v415
  %v589 = vmax.f32 %v587, %v421
  %v590 = vmax.f32 %v588, %v427
  %v591 = vmax.f32 %v589, %v433
  %v592 = vmax.f32 %v590, %v439
  %v593 = vmax.f32 %v591, %v445
  %v594 = vmax.f32 %v592, %v451
  %v595 = vmax.f32 %v593, %v457
  %v596 = vmax.f32 %v594, %v463
  %v597 = vmax.f32 %v595, %v469
  %v598 = vmax.f32 %v596, %v475
  %v599 = vmax.f32 %v597, %v481
  %v600 = vmax.f32 %v598, %v487
  %v601 = vmax.f32 %v599, %v493
  %v602 = vmax.f32 %v600, %v499
  %v603 = vmax.f32 %v601, %v505
  %v604 = vmax.f32 %v602, %v511
  %v605 = vmax.f32 %v603, %v517
  %v606 = vmax.f32 %v604, %v523
  %v607 = vmax.f32 %v605, %v529
  %v608 = vmax.f32 %v606, %v535
  %v609 = vmax.f32 %v607, %v541
  %v610 = vmax.f32 %v608, %v547
  %v611 = vmax.f32 %v609, %v553
  %v612 = vmax.f32 %v610, %v559
  %v613 = vmax.f32 %v611, %v565
  %v614 = vmax.f32 %v612, %v571
  %v615 = vmax.f32 %v613, %v577
  %v616 = vmax.f32 %v614, %v583
  %v617 = vmax.f32 %v615, %v616
  %v618 = vrot.slane %v617, 4
  %v619 = vmax.f32 %v617, %v618
  %v620 = vrot.slane %v619, 2
  %v621 = vmax.f32 %v619, %v620
  %v622 = vrot.slane %v621, 1
  %v623 = vmax.f32 %v621, %v622
  %v624 = vmax.f32 %v399, %v411
  %v625 = vmax.f32 %v405, %v417
  %v626 = vmax.f32 %v624, %v423
  %v627 = vmax.f32 %v625, %v429
  %v628 = vmax.f32 %v626, %v435
  %v629 = vmax.f32 %v627, %v441
  %v630 = vmax.f32 %v628, %v447
  %v631 = vmax.f32 %v629, %v453
  %v632 = vmax.f32 %v630, %v459
  %v633 = vmax.f32 %v631, %v465
  %v634 = vmax.f32 %v632, %v471
  %v635 = vmax.f32 %v633, %v477
  %v636 = vmax.f32 %v634, %v483
  %v637 = vmax.f32 %v635, %v489
  %v638 = vmax.f32 %v636, %v495
  %v639 = vmax.f32 %v637, %v501
  %v640 = vmax.f32 %v638, %v507
  %v641 = vmax.f32 %v639, %v513
  %v642 = vmax.f32 %v640, %v519
  %v643 = vmax.f32 %v641, %v525
  %v644 = vmax.f32 %v642, %v531
  %v645 = vmax.f32 %v643, %v537
  %v646 = vmax.f32 %v644, %v543
  %v647 = vmax.f32 %v645, %v549
  %v648 = vmax.f32 %v646, %v555
  %v649 = vmax.f32 %v647, %v561
  %v650 = vmax.f32 %v648, %v567
  %v651 = vmax.f32 %v649, %v573
  %v652 = vmax.f32 %v650, %v579
  %v653 = vmax.f32 %v651, %v585
  %v654 = vmax.f32 %v652, %v653
  %v655 = vrot.slane %v654, 4
  %v656 = vmax.f32 %v654, %v655
  %v657 = vrot.slane %v656, 2
  %v658 = vmax.f32 %v656, %v657
  %v659 = vrot.slane %v658, 1
  %v660 = vmax.f32 %v658, %v659
  %v661 = vsub.f32 %v397, %v623
  %v662 = vsub.f32 %v399, %v660
  %v663 = vsub.f32 %v403, %v623
  %v664 = vsub.f32 %v405, %v660
  %v665 = vsub.f32 %v409, %v623
  %v666 = vsub.f32 %v411, %v660
  %v667 = vsub.f32 %v415, %v623
  %v668 = vsub.f32 %v417, %v660
  %v669 = vsub.f32 %v421, %v623
  %v670 = vsub.f32 %v423, %v660
  %v671 = vsub.f32 %v427, %v623
  %v672 = vsub.f32 %v429, %v660
  %v673 = vsub.f32 %v433, %v623
  %v674 = vsub.f32 %v435, %v660
  %v675 = vsub.f32 %v439, %v623
  %v676 = vsub.f32 %v441, %v660
  %v677 = vsub.f32 %v445, %v623
  %v678 = vsub.f32 %v447, %v660
  %v679 = vsub.f32 %v451, %v623
  %v680 = vsub.f32 %v453, %v660
  %v681 = vsub.f32 %v457, %v623
  %v682 = vsub.f32 %v459, %v660
  %v683 = vsub.f32 %v463, %v623
  %v684 = vsub.f32 %v465, %v660
  %v685 = vsub.f32 %v469, %v623
  %v686 = vsub.f32 %v471, %v660
  %v687 = vsub.f32 %v475, %v623
  %v688 = vsub.f32 %v477, %v660
  %v689 = vsub.f32 %v481, %v623
  %v690 = vsub.f32 %v483, %v660
  %v691 = vsub.f32 %v487, %v623
  %v692 = vsub.f32 %v489, %v660
  %v693 = vsub.f32 %v493, %v623
  %v694 = vsub.f32 %v495, %v660
  %v695 = vsub.f32 %v499, %v623
  %v696 = vsub.f32 %v501, %v660
  %v697 = vsub.f32 %v505, %v623
  %v698 = vsub.f32 %v507, %v660
  %v699 = vsub.f32 %v511, %v623
  %v700 = vsub.f32 %v513, %v660
  %v701 = vsub.f32 %v517, %v623
  %v702 = vsub.f32 %v519, %v660
  %v703 = vsub.f32 %v523, %v623
  %v704 = vsub.f32 %v525, %v660
  %v705 = vsub.f32 %v529, %v623
  %v706 = vsub.f32 %v531, %v660
  %v707 = vsub.f32 %v535, %v623
  %v708 = vsub.f32 %v537, %v660
  %v709 = vsub.f32 %v541, %v623
  %v710 = vsub.f32 %v543, %v660
  %v711 = vsub.f32 %v547, %v623
  %v712 = vsub.f32 %v549, %v660
  %v713 = vsub.f32 %v553, %v623
  %v714 = vsub.f32 %v555, %v660
  %v715 = vsub.f32 %v559, %v623
  %v716 = vsub.f32 %v561, %v660
  %v717 = vsub.f32 %v565, %v623
  %v718 = vsub.f32 %v567, %v660
  %v719 = vsub.f32 %v571, %v623
  %v720 = vsub.f32 %v573, %v660
  %v721 = vsub.f32 %v577, %v623
  %v722 = vsub.f32 %v579, %v660
  %v723 = vsub.f32 %v583, %v623
  %v724 = vsub.f32 %v585, %v660
  %v725 = vmul.f32 %v661, 1.442695
  %v726 = vpow.pop %v725
  %v727 = vmul.f32 %v662, 1.442695
  %v728 = vpow.pop %v727
  %v729 = vmul.f32 %v663, 1.442695
  %v730 = vpow.pop %v729
  %v731 = vmul.f32 %v664, 1.442695
  %v732 = vpow.pop %v731
  %v733 = vmul.f32 %v665, 1.442695
  %v734 = vpow.pop %v733
  %v735 = vmul.f32 %v666, 1.442695
  %v736 = vpow.pop %v735
  %v737 = vmul.f32 %v667, 1.442695
  %v738 = vpow.pop %v737
  %v739 = vmul.f32 %v668, 1.442695
  %v740 = vpow.pop %v739
  %v741 = vmul.f32 %v669, 1.442695
  %v742 = vpow.pop %v741
  %v743 = vmul.f32 %v670, 1.442695
  %v744 = vpow.pop %v743
  %v745 = vmul.f32 %v671, 1.442695
  %v746 = vpow.pop %v745
  %v747 = vmul.f32 %v672, 1.442695
  %v748 = vpow.pop %v747
  %v749 = vmul.f32 %v673, 1.442695
  %v750 = vpow.pop %v749
  %v751 = vmul.f32 %v674, 1.442695
  %v752 = vpow.pop %v751
  %v753 = vmul.f32 %v675, 1.442695
  %v754 = vpow.pop %v753
  %v755 = vmul.f32 %v676, 1.442695
  %v756 = vpow.pop %v755
  %v757 = vmul.f32 %v677, 1.442695
  %v758 = vpow.pop %v757
  %v759 = vmul.f32 %v678, 1.442695
  %v760 = vpow.pop %v759
  %v761 = vmul.f32 %v679, 1.442695
  %v762 = vpow.pop %v761
  %v763 = vmul.f32 %v680, 1.442695
  %v764 = vpow.pop %v763
  %v765 = vmul.f32 %v681, 1.442695
  %v766 = vpow.pop %v765
  %v767 = vmul.f32 %v682, 1.442695
  %v768 = vpow.pop %v767
  %v769 = vmul.f32 %v683, 1.442695
  %v770 = vpow.pop %v769
  %v771 = vmul.f32 %v684, 1.442695
  %v772 = vpow.pop %v771
  %v773 = vmul.f32 %v685, 1.442695
  %v774 = vpow.pop %v773
  %v775 = vmul.f32 %v686, 1.442695
  %v776 = vpow.pop %v775
  %v777 = vmul.f32 %v687, 1.442695
  %v778 = vpow.pop %v777
  %v779 = vmul.f32 %v688, 1.442695
  %v780 = vpow.pop %v779
  %v781 = vmul.f32 %v689, 1.442695
  %v782 = vpow.pop %v781
  %v783 = vmul.f32 %v690, 1.442695
  %v784 = vpow.pop %v783
  %v785 = vmul.f32 %v691, 1.442695
  %v786 = vpow.pop %v785
  %v787 = vmul.f32 %v692, 1.442695
  %v788 = vpow.pop %v787
  %v789 = vmul.f32 %v693, 1.442695
  %v790 = vpow.pop %v789
  %v791 = vmul.f32 %v694, 1.442695
  %v792 = vpow.pop %v791
  %v793 = vmul.f32 %v695, 1.442695
  %v794 = vpow.pop %v793
  %v795 = vmul.f32 %v696, 1.442695
  %v796 = vpow.pop %v795
  %v797 = vmul.f32 %v697, 1.442695
  %v798 = vpow.pop %v797
  %v799 = vmul.f32 %v698, 1.442695
  %v800 = vpow.pop %v799
  %v801 = vmul.f32 %v699, 1.442695
  %v802 = vpow.pop %v801
  %v803 = vmul.f32 %v700, 1.442695
  %v804 = vpow.pop %v803
  %v805 = vmul.f32 %v701, 1.442695
  %v806 = vpow.pop %v805
  %v807 = vmul.f32 %v702, 1.442695
  %v808 = vpow.pop %v807
  %v809 = vmul.f32 %v703, 1.442695
  %v810 = vpow.pop %v809
  %v811 = vmul.f32 %v704, 1.442695
  %v812 = vpow.pop %v811
  %v813 = vmul.f32 %v705, 1.442695
  %v814 = vpow.pop %v813
  %v815 = vmul.f32 %v706, 1.442695
  %v816 = vpow.pop %v815
  %v817 = vmul.f32 %v707, 1.442695
  %v818 = vpow.pop %v817
  %v819 = vmul.f32 %v708, 1.442695
  %v820 = vpow.pop %v819
  %v821 = vmul.f32 %v709, 1.442695
  %v822 = vpow.pop %v821
  %v823 = vmul.f32 %v710, 1.442695
  %v824 = vpow.pop %v823
  %v825 = vmul.f32 %v711, 1.442695
  %v826 = vpow.pop %v825
  %v827 = vmul.f32 %v712, 1.442695
  %v828 = vpow.pop %v827
  %v829 = vmul.f32 %v713, 1.442695
  %v830 = vpow.pop %v829
  %v831 = vmul.f32 %v714, 1.442695
  %v832 = vpow.pop %v831
  %v833 = vmul.f32 %v715, 1.442695
  %v834 = vpow.pop %v833
  %v835 = vmul.f32 %v716, 1.442695
  %v836 = vpow.pop %v835
  %v837 = vmul.f32 %v717, 1.442695
  %v838 = vpow.pop %v837
  %v839 = vmul.f32 %v718, 1.442695
  %v840 = vpow.pop %v839
  %v841 = vmul.f32 %v719, 1.442695
  %v842 = vpow.pop %v841
  %v843 = vmul.f32 %v720, 1.442695
  %v844 = vpow.pop %v843
  %v845 = vmul.f32 %v721, 1.442695
  %v846 = vpow.pop %v845
  %v847 = vmul.f32 %v722, 1.442695
  %v848 = vpow.pop %v847
  %v849 = vmul.f32 %v723, 1.442695
  %v850 = vpow.pop %v849
  %v851 = vmul.f32 %v724, 1.442695
  %v852 = vpow.pop %v851
  %v853 = vpack.c.bf16 %v730, %v726
  %v854 = vpack.c.bf16 %v732, %v728
  %v855 = vpack.c.bf16 %v738, %v734
  %v856 = vpack.c.bf16 %v740, %v736
  %v857 = vpack.c.bf16 %v746, %v742
  %v858 = vpack.c.bf16 %v748, %v744
  %v859 = vpack.c.bf16 %v754, %v750
  %v860 = vpack.c.bf16 %v756, %v752
  %v861 = vpack.c.bf16 %v762, %v758
  %v862 = vpack.c.bf16 %v764, %v760
  %v863 = vpack.c.bf16 %v770, %v766
  %v864 = vpack.c.bf16 %v772, %v768
  %v865 = vpack.c.bf16 %v778, %v774
  %v866 = vpack.c.bf16 %v780, %v776
  %v867 = vpack.c.bf16 %v786, %v782
  %v868 = vpack.c.bf16 %v788, %v784
  %v869 = vpack.c.bf16 %v794, %v790
  %v870 = vpack.c.bf16 %v796, %v792
  %v871 = vpack.c.bf16 %v802, %v798
  %v872 = vpack.c.bf16 %v804, %v800
  %v873 = vpack.c.bf16 %v810, %v806
  %v874 = vpack.c.bf16 %v812, %v808
  %v875 = vpack.c.bf16 %v818, %v814
  %v876 = vpack.c.bf16 %v820, %v816
  %v877 = vpack.c.bf16 %v826, %v822
  %v878 = vpack.c.bf16 %v828, %v824
  %v879 = vpack.c.bf16 %v834, %v830
  %v880 = vpack.c.bf16 %v836, %v832
  %v881 = vpack.c.bf16 %v842, %v838
  %v882 = vpack.c.bf16 %v844, %v840
  %v883 = vpack.c.bf16 %v850, %v846
  %v884 = vpack.c.bf16 %v852, %v848
  %v885 = vpack.c.bf16 %v147, %v141
  %v886 = vpack.c.bf16 %v149, %v143
  %v887 = vpack.c.bf16 %v153, %v153
  %v888 = vpack.c.bf16 %v155, %v155
  %889 = vmatprep.subr.bf16.mxu0 %v854
  %890 = vmatpush1.bf16.msra.mxu0 %v853
  %891 = vmatprep.subr.bf16.mxu0 %v856
  %892 = vmatpush1.bf16.msra.mxu0 %v855
  %893 = vmatprep.subr.bf16.mxu0 %v858
  %894 = vmatpush1.bf16.msra.mxu0 %v857
  %895 = vmatprep.subr.bf16.mxu0 %v860
  %896 = vmatpush1.bf16.msra.mxu0 %v859
  %897 = vmatprep.subr.bf16.mxu0 %v862
  %898 = vmatpush1.bf16.msra.mxu0 %v861
  %899 = vmatprep.subr.bf16.mxu0 %v864
  %900 = vmatpush1.bf16.msra.mxu0 %v863
  %901 = vmatprep.subr.bf16.mxu0 %v866
  %902 = vmatpush1.bf16.msra.mxu0 %v865
  %903 = vmatprep.subr.bf16.mxu0 %v868
  %904 = vmatpush1.bf16.msra.mxu0 %v867
  %905 = vmatprep.subr.bf16.mxu0 %v870
  %906 = vmatpush1.bf16.msra.mxu0 %v869
  %907 = vmatprep.subr.bf16.mxu0 %v872
  %908 = vmatpush1.bf16.msra.mxu0 %v871
  %909 = vmatprep.subr.bf16.mxu0 %v874
  %910 = vmatpush1.bf16.msra.mxu0 %v873
  %911 = vmatprep.subr.bf16.mxu0 %v876
  %912 = vmatpush1.bf16.msra.mxu0 %v875
  %913 = vmatprep.subr.bf16.mxu0 %v878
  %914 = vmatpush1.bf16.msra.mxu0 %v877
  %915 = vmatprep.subr.bf16.mxu0 %v880
  %916 = vmatpush1.bf16.msra.mxu0 %v879
  %917 = vmatprep.subr.bf16.mxu0 %v882
  %918 = vmatpush1.bf16.msra.mxu0 %v881
  %919 = vmatprep.subr.bf16.mxu0 %v884
  %920 = vmatpush1.bf16.msra.mxu0 %v883
  %921 = vmatprep.mubr.bf16.mxu0 %v886
  %922 = vmatmul.mubr.bf16.gmra.mrb[0].mxu0 %v885
  %v923 = vpop.f32.mrb[0].mxu0
  %v924 = vadd.f32 0.0, %v923
  %v925 = vpop.f32.mrb[0].mxu0
  %v926 = vadd.f32 0.0, %v925
  %v927 = vpop.f32.mrb[0].mxu0
  %v928 = vadd.f32 0.0, %v927
  %v929 = vpop.f32.mrb[0].mxu0
  %v930 = vadd.f32 0.0, %v929
  %931 = vmatprep.mubr.bf16.mxu0 %v888
  %932 = vmatmul.mubr.bf16.gmra.mrb[0].mxu0 %v887
  %v933 = vpop.f32.mrb[0].mxu0
  %v934 = vadd.f32 0.0, %v933
  %v935 = vpop.f32.mrb[0].mxu0
  %v936 = vadd.f32 0.0, %v935
  %v937 = vpop.f32.mrb[0].mxu0
  %v938 = vpop.f32.mrb[0].mxu0
  %939 = vdwg.mxu0
  %v940 = vrcp.pop %v934
  %v941 = vrcp.pop %v936
  %v942 = vstv %s18
  %v943 = vmul.f32 %v942, %v940
  %v944 = vmul.f32 %v942, %v941
  %v945 = vlaneseq
  %v946 = vshrl.u32 %v945, 7
  %v947 = vsub.s32 0, %v946
  %v948 = vrot.slane %v943, %v947
  %v949 = vlaneseq
  %v950 = vshrl.u32 %v949, 7
  %v951 = vsub.s32 0, %v950
  %v952 = vrot.slane %v944, %v951
  %v953 = vmul.f32 %v924, %v948
  %v954 = vmul.f32 %v926, %v952
  %v955 = vmul.f32 %v928, %v948
  %v956 = vmul.f32 %v930, %v952
  %v957 = vadd.f32 %v953, %v19
  %v958 = vadd.f32 %v954, %v20
  %v959 = vadd.f32 %v955, %v21
  %v960 = vadd.f32 %v956, %v22
  %961 = vst [vmem:[%s4] sm:$0xff] %v957
  %962 = vst [vmem:[%s4 + $0x8] sm:$0xff] %v958
  %963 = vst [vmem:[%s4 + $0x10] sm:$0xff] %v959
  %964 = vst [vmem:[%s4 + $0x18] sm:$0xff] %v960
  %s965 = scalar_lea.vmem %s0, 32
  %v966 = vld [vmem:[%s965] sm:$0xff]
  %v967 = vld [vmem:[%s965 + $0x8] sm:$0xff]
  %v968 = vld [vmem:[%s965 + $0x10] sm:$0xff]
  %v969 = vld [vmem:[%s965 + $0x18] sm:$0xff]
  %v970 = vld [vmem:[%s1] sm:$0xff]
  %v971 = vld [vmem:[%s1 + $0x8] sm:$0xff]
  %v972 = vld [vmem:[%s1 + $0x10] sm:$0xff]
  %v973 = vld [vmem:[%s1 + $0x18] sm:$0xff]
  %v974 = vld [vmem:[%s1 + $0x20] sm:$0xff]
  %v975 = vld [vmem:[%s2] sm:$0xff]
  %v976 = vld [vmem:[%s2 + $0x8] sm:$0xff]
  %v977 = vld [vmem:[%s2 + $0x10] sm:$0xff]
  %v978 = vld [vmem:[%s2 + $0x18] sm:$0xff]
  %v979 = vld [vmem:[%s2 + $0x20] sm:$0xff]
  %981 = vset.pattern.permute.xlu0 0
  %982 = vperm.xlu0 %981, %v975
  %v983 = vpop.permute.xlu0 %982
  %986 = vset.pattern.permute.xlu0 0
  %987 = vperm.xlu0 %986, %v976
  %v988 = vpop.permute.xlu0 %987
  %991 = vset.pattern.permute.xlu0 0
  %992 = vperm.xlu0 %991, %v977
  %v993 = vpop.permute.xlu0 %992
  %996 = vset.pattern.permute.xlu0 0
  %997 = vperm.xlu0 %996, %v978
  %v998 = vpop.permute.xlu0 %997
  %1001 = vset.pattern.permute.xlu0 0
  %1002 = vperm.xlu0 %1001, %v979
  %v1003 = vpop.permute.xlu0 %1002
  %v1006 = vsel %vm58, %v970, 0
  %v1009 = vsel %vm58, %v971, 0
  %v1012 = vsel %vm58, %v972, 0
  %v1015 = vsel %vm58, %v973, 0
  %v1018 = vsel %vm58, %v974, 0
  %1020 = vmatprep.subr.mxu0 %v967
  %1021 = vmatpush1.msra.mxu0 %v966
  %1022 = vmatprep.subr.mxu0 %v969
  %1023 = vmatpush1.msra.mxu0 %v968
  %1024 = vmatprep.subr.mxu0 0.0
  %1025 = vmatpush1.msra.mxu0 0.0
  %1026 = vmatprep.subr.mxu0 0.0
  %1027 = vmatpush1.msra.mxu0 0.0
  %1028 = vmatprep.subr.mxu0 0.0
  %1029 = vmatpush1.msra.mxu0 0.0
  %1030 = vmatprep.subr.mxu0 0.0
  %1031 = vmatpush1.msra.mxu0 0.0
  %1032 = vmatprep.subr.mxu0 0.0
  %1033 = vmatpush1.msra.mxu0 0.0
  %1034 = vmatprep.subr.mxu0 0.0
  %1035 = vmatpush1.msra.mxu0 0.0
  %1036 = vmatprep.subr.mxu0 0.0
  %1037 = vmatpush1.msra.mxu0 0.0
  %1038 = vmatprep.subr.mxu0 0.0
  %1039 = vmatpush1.msra.mxu0 0.0
  %1040 = vmatprep.subr.mxu0 0.0
  %1041 = vmatpush1.msra.mxu0 0.0
  %1042 = vmatprep.subr.mxu0 0.0
  %1043 = vmatpush1.msra.mxu0 0.0
  %1044 = vmatprep.subr.mxu0 0.0
  %1045 = vmatpush1.msra.mxu0 0.0
  %1046 = vmatprep.subr.mxu0 0.0
  %1047 = vmatpush1.msra.mxu0 0.0
  %1048 = vmatprep.subr.mxu0 0.0
  %1049 = vmatpush1.msra.mxu0 0.0
  %1050 = vmatprep.subr.mxu0 0.0
  %1051 = vmatpush1.msra.mxu0 0.0
  %1052 = vmatprep.subr.mxu0 0.0
  %1053 = vmatpush1.msra.mxu0 0.0
  %1054 = vmatprep.subr.mxu0 0.0
  %1055 = vmatpush1.msra.mxu0 0.0
  %1056 = vmatprep.subr.mxu0 0.0
  %1057 = vmatpush1.msra.mxu0 0.0
  %1058 = vmatprep.subr.mxu0 0.0
  %1059 = vmatpush1.msra.mxu0 0.0
  %1060 = vmatprep.subr.mxu0 0.0
  %1061 = vmatpush1.msra.mxu0 0.0
  %1062 = vmatprep.subr.mxu0 0.0
  %1063 = vmatpush1.msra.mxu0 0.0
  %1064 = vmatprep.subr.mxu0 0.0
  %1065 = vmatpush1.msra.mxu0 0.0
  %1066 = vmatprep.subr.mxu0 0.0
  %1067 = vmatpush1.msra.mxu0 0.0
  %1068 = vmatprep.subr.mxu0 0.0
  %1069 = vmatpush1.msra.mxu0 0.0
  %1070 = vmatprep.subr.mxu0 0.0
  %1071 = vmatpush1.msra.mxu0 0.0
  %1072 = vmatprep.subr.mxu0 0.0
  %1073 = vmatpush1.msra.mxu0 0.0
  %1074 = vmatprep.subr.mxu0 0.0
  %1075 = vmatpush1.msra.mxu0 0.0
  %1076 = vmatprep.subr.mxu0 0.0
  %1077 = vmatpush1.msra.mxu0 0.0
  %1078 = vmatprep.subr.mxu0 0.0
  %1079 = vmatpush1.msra.mxu0 0.0
  %1080 = vmatprep.subr.mxu0 0.0
  %1081 = vmatpush1.msra.mxu0 0.0
  %1082 = vmatprep.subr.mxu0 0.0
  %1083 = vmatpush1.msra.mxu0 0.0
  %1084 = vmatprep.mubr.f32.mxu0 0.0
  %1085 = vmatmul.mubr.f32.gmra.mrb[0].mxu0 %v1006
  %v1086 = vpop.f32.mrb[0].mxu0
  %v1087 = vadd.f32 %v983, %v1086
  %v1088 = vpop.f32.mrb[0].mxu0
  %v1089 = vadd.f32 %v983, %v1088
  %1090 = vmatprep.mubr.f32.mxu0 0.0
  %1091 = vmatmul.mubr.f32.gmra.mrb[0].mxu0 %v1009
  %v1092 = vpop.f32.mrb[0].mxu0
  %v1093 = vadd.f32 %v988, %v1092
  %v1094 = vpop.f32.mrb[0].mxu0
  %v1095 = vadd.f32 %v988, %v1094
  %1096 = vmatprep.mubr.f32.mxu0 0.0
  %1097 = vmatmul.mubr.f32.gmra.mrb[0].mxu0 %v1012
  %v1098 = vpop.f32.mrb[0].mxu0
  %v1099 = vadd.f32 %v993, %v1098
  %v1100 = vpop.f32.mrb[0].mxu0
  %v1101 = vadd.f32 %v993, %v1100
  %1102 = vmatprep.mubr.f32.mxu0 0.0
  %1103 = vmatmul.mubr.f32.gmra.mrb[0].mxu0 %v1015
  %v1104 = vpop.f32.mrb[0].mxu0
  %v1105 = vadd.f32 %v998, %v1104
  %v1106 = vpop.f32.mrb[0].mxu0
  %v1107 = vadd.f32 %v998, %v1106
  %1108 = vmatprep.mubr.f32.mxu0 0.0
  %1109 = vmatmul.mubr.f32.gmra.mrb[0].mxu0 %v1018
  %v1110 = vpop.f32.mrb[0].mxu0
  %v1111 = vadd.f32 %v1003, %v1110
  %v1112 = vpop.f32.mrb[0].mxu0
  %v1113 = vadd.f32 %v1003, %v1112
  %1114 = vdwg.mxu0
  %1115 = vxpose.xlu0.b32.start [1/16] %v1111, 128
  %1116 = vxpose.xlu0.b32.cont [2/16] 0.0, 128
  %1117 = vxpose.xlu0.b32.cont [3/16] 0.0, 128
  %1118 = vxpose.xlu0.b32.cont [4/16] 0.0, 128
  %1119 = vxpose.xlu0.b32.cont [5/16] 0.0, 128
  %1120 = vxpose.xlu0.b32.cont [6/16] 0.0, 128
  %1121 = vxpose.xlu0.b32.cont [7/16] 0.0, 128
  %1122 = vxpose.xlu0.b32.cont [8/16] 0.0, 128
  %1123 = vxpose.xlu0.b32.cont [9/16] 0.0, 128
  %1124 = vxpose.xlu0.b32.cont [10/16] 0.0, 128
  %1125 = vxpose.xlu0.b32.cont [11/16] 0.0, 128
  %1126 = vxpose.xlu0.b32.cont [12/16] 0.0, 128
  %1127 = vxpose.xlu0.b32.cont [13/16] 0.0, 128
  %1128 = vxpose.xlu0.b32.cont [14/16] 0.0, 128
  %1129 = vxpose.xlu0.b32.cont [15/16] 0.0, 128
  %1130 = vxpose.xlu0.b32.end [16/16] 0.0, 128
  %v1131 = vpop.trf.xlu0
  %v1132 = vpop.trf.xlu0
  %v1133 = vpop.trf.xlu0
  %v1134 = vpop.trf.xlu0
  %v1135 = vpop.trf.xlu0
  %v1136 = vpop.trf.xlu0
  %v1137 = vpop.trf.xlu0
  %v1138 = vpop.trf.xlu0
  %v1139 = vpop.trf.xlu0
  %v1140 = vpop.trf.xlu0
  %v1141 = vpop.trf.xlu0
  %v1142 = vpop.trf.xlu0
  %v1143 = vpop.trf.xlu0
  %v1144 = vpop.trf.xlu0
  %v1145 = vpop.trf.xlu0
  %v1146 = vpop.trf.xlu0
  %1147 = vxpose.xlu0.b32.start [1/16] %v1113, 128
  %1148 = vxpose.xlu0.b32.cont [2/16] 0.0, 128
  %1149 = vxpose.xlu0.b32.cont [3/16] 0.0, 128
  %1150 = vxpose.xlu0.b32.cont [4/16] 0.0, 128
  %1151 = vxpose.xlu0.b32.cont [5/16] 0.0, 128
  %1152 = vxpose.xlu0.b32.cont [6/16] 0.0, 128
  %1153 = vxpose.xlu0.b32.cont [7/16] 0.0, 128
  %1154 = vxpose.xlu0.b32.cont [8/16] 0.0, 128
  %1155 = vxpose.xlu0.b32.cont [9/16] 0.0, 128
  %1156 = vxpose.xlu0.b32.cont [10/16] 0.0, 128
  %1157 = vxpose.xlu0.b32.cont [11/16] 0.0, 128
  %1158 = vxpose.xlu0.b32.cont [12/16] 0.0, 128
  %1159 = vxpose.xlu0.b32.cont [13/16] 0.0, 128
  %1160 = vxpose.xlu0.b32.cont [14/16] 0.0, 128
  %1161 = vxpose.xlu0.b32.cont [15/16] 0.0, 128
  %1162 = vxpose.xlu0.b32.end [16/16] 0.0, 128
  %v1163 = vpop.trf.xlu0
  %v1164 = vpop.trf.xlu0
  %v1165 = vpop.trf.xlu0
  %v1166 = vpop.trf.xlu0
  %v1167 = vpop.trf.xlu0
  %v1168 = vpop.trf.xlu0
  %v1169 = vpop.trf.xlu0
  %v1170 = vpop.trf.xlu0
  %v1171 = vpop.trf.xlu0
  %v1172 = vpop.trf.xlu0
  %v1173 = vpop.trf.xlu0
  %v1174 = vpop.trf.xlu0
  %v1175 = vpop.trf.xlu0
  %v1176 = vpop.trf.xlu0
  %v1177 = vpop.trf.xlu0
  %v1178 = vpop.trf.xlu0
  %v1180 = vsel %vm233, %v1131, 0
  %v1183 = vsel %vm233, %v1132, 0
  %v1186 = vsel %vm233, %v1133, 0
  %v1189 = vsel %vm233, %v1134, 0
  %v1192 = vsel %vm233, %v1135, 0
  %v1195 = vsel %vm233, %v1136, 0
  %v1198 = vsel %vm233, %v1137, 0
  %v1201 = vsel %vm233, %v1138, 0
  %v1204 = vsel %vm233, %v1139, 0
  %v1207 = vsel %vm233, %v1140, 0
  %v1210 = vsel %vm233, %v1141, 0
  %v1213 = vsel %vm233, %v1142, 0
  %v1216 = vsel %vm233, %v1143, 0
  %v1219 = vsel %vm233, %v1144, 0
  %v1222 = vsel %vm233, %v1145, 0
  %v1225 = vsel %vm233, %v1146, 0
  %v1228 = vsel %vm233, %v1163, 0
  %v1231 = vsel %vm233, %v1164, 0
  %v1234 = vsel %vm233, %v1165, 0
  %v1237 = vsel %vm233, %v1166, 0
  %v1240 = vsel %vm233, %v1167, 0
  %v1243 = vsel %vm233, %v1168, 0
  %v1246 = vsel %vm233, %v1169, 0
  %v1249 = vsel %vm233, %v1170, 0
  %v1252 = vsel %vm233, %v1171, 0
  %v1255 = vsel %vm233, %v1172, 0
  %v1258 = vsel %vm233, %v1173, 0
  %v1261 = vsel %vm233, %v1174, 0
  %v1264 = vsel %vm233, %v1175, 0
  %v1267 = vsel %vm233, %v1176, 0
  %v1270 = vsel %vm233, %v1177, 0
  %v1273 = vsel %vm233, %v1178, 0
  %1275 = vmatprep.subr.mxu0 %v1107
  %1276 = vmatpush1.msra.mxu0 %v1105
  %1277 = vmatprep.subr.mxu0 0.0
  %1278 = vmatpush1.msra.mxu0 0.0
  %1279 = vmatprep.subr.mxu0 0.0
  %1280 = vmatpush1.msra.mxu0 0.0
  %1281 = vmatprep.subr.mxu0 0.0
  %1282 = vmatpush1.msra.mxu0 0.0
  %1283 = vmatprep.subr.mxu0 0.0
  %1284 = vmatpush1.msra.mxu0 0.0
  %1285 = vmatprep.subr.mxu0 0.0
  %1286 = vmatpush1.msra.mxu0 0.0
  %1287 = vmatprep.subr.mxu0 0.0
  %1288 = vmatpush1.msra.mxu0 0.0
  %1289 = vmatprep.subr.mxu0 0.0
  %1290 = vmatpush1.msra.mxu0 0.0
  %1291 = vmatprep.subr.mxu0 0.0
  %1292 = vmatpush1.msra.mxu0 0.0
  %1293 = vmatprep.subr.mxu0 0.0
  %1294 = vmatpush1.msra.mxu0 0.0
  %1295 = vmatprep.subr.mxu0 0.0
  %1296 = vmatpush1.msra.mxu0 0.0
  %1297 = vmatprep.subr.mxu0 0.0
  %1298 = vmatpush1.msra.mxu0 0.0
  %1299 = vmatprep.subr.mxu0 0.0
  %1300 = vmatpush1.msra.mxu0 0.0
  %1301 = vmatprep.subr.mxu0 0.0
  %1302 = vmatpush1.msra.mxu0 0.0
  %1303 = vmatprep.subr.mxu0 0.0
  %1304 = vmatpush1.msra.mxu0 0.0
  %1305 = vmatprep.subr.mxu0 0.0
  %1306 = vmatpush1.msra.mxu0 0.0
  %1307 = vmatprep.subr.mxu0 0.0
  %1308 = vmatpush1.msra.mxu0 0.0
  %1309 = vmatprep.subr.mxu0 0.0
  %1310 = vmatpush1.msra.mxu0 0.0
  %1311 = vmatprep.subr.mxu0 0.0
  %1312 = vmatpush1.msra.mxu0 0.0
  %1313 = vmatprep.subr.mxu0 0.0
  %1314 = vmatpush1.msra.mxu0 0.0
  %1315 = vmatprep.subr.mxu0 0.0
  %1316 = vmatpush1.msra.mxu0 0.0
  %1317 = vmatprep.subr.mxu0 0.0
  %1318 = vmatpush1.msra.mxu0 0.0
  %1319 = vmatprep.subr.mxu0 0.0
  %1320 = vmatpush1.msra.mxu0 0.0
  %1321 = vmatprep.subr.mxu0 0.0
  %1322 = vmatpush1.msra.mxu0 0.0
  %1323 = vmatprep.subr.mxu0 0.0
  %1324 = vmatpush1.msra.mxu0 0.0
  %1325 = vmatprep.subr.mxu0 0.0
  %1326 = vmatpush1.msra.mxu0 0.0
  %1327 = vmatprep.subr.mxu0 0.0
  %1328 = vmatpush1.msra.mxu0 0.0
  %1329 = vmatprep.subr.mxu0 0.0
  %1330 = vmatpush1.msra.mxu0 0.0
  %1331 = vmatprep.subr.mxu0 0.0
  %1332 = vmatpush1.msra.mxu0 0.0
  %1333 = vmatprep.subr.mxu0 0.0
  %1334 = vmatpush1.msra.mxu0 0.0
  %1335 = vmatprep.subr.mxu0 0.0
  %1336 = vmatpush1.msra.mxu0 0.0
  %1337 = vmatprep.subr.mxu0 0.0
  %1338 = vmatpush1.msra.mxu0 0.0
  %1339 = vmatprep.mubr.f32.mxu0 0.0
  %1340 = vmatmul.mubr.f32.gmra.mrb[0].mxu0 %v1180
  %v1341 = vpop.f32.mrb[0].mxu0
  %v1342 = vadd.f32 0.0, %v1341
  %v1343 = vpop.f32.mrb[0].mxu0
  %v1344 = vadd.f32 0.0, %v1343
  %1345 = vmatprep.mubr.f32.mxu0 0.0
  %1346 = vmatmul.mubr.f32.gmra.mrb[0].mxu0 %v1183
  %v1347 = vpop.f32.mrb[0].mxu0
  %v1348 = vadd.f32 0.0, %v1347
  %v1349 = vpop.f32.mrb[0].mxu0
  %v1350 = vadd.f32 0.0, %v1349
  %1351 = vmatprep.mubr.f32.mxu0 0.0
  %1352 = vmatmul.mubr.f32.gmra.mrb[0].mxu0 %v1186
  %v1353 = vpop.f32.mrb[0].mxu0
  %v1354 = vadd.f32 0.0, %v1353
  %v1355 = vpop.f32.mrb[0].mxu0
  %v1356 = vadd.f32 0.0, %v1355
  %1357 = vmatprep.mubr.f32.mxu0 0.0
  %1358 = vmatmul.mubr.f32.gmra.mrb[0].mxu0 %v1189
  %v1359 = vpop.f32.mrb[0].mxu0
  %v1360 = vadd.f32 0.0, %v1359
  %v1361 = vpop.f32.mrb[0].mxu0
  %v1362 = vadd.f32 0.0, %v1361
  %1363 = vmatprep.mubr.f32.mxu0 0.0
  %1364 = vmatmul.mubr.f32.gmra.mrb[0].mxu0 %v1192
  %v1365 = vpop.f32.mrb[0].mxu0
  %v1366 = vadd.f32 0.0, %v1365
  %v1367 = vpop.f32.mrb[0].mxu0
  %v1368 = vadd.f32 0.0, %v1367
  %1369 = vmatprep.mubr.f32.mxu0 0.0
  %1370 = vmatmul.mubr.f32.gmra.mrb[0].mxu0 %v1195
  %v1371 = vpop.f32.mrb[0].mxu0
  %v1372 = vadd.f32 0.0, %v1371
  %v1373 = vpop.f32.mrb[0].mxu0
  %v1374 = vadd.f32 0.0, %v1373
  %1375 = vmatprep.mubr.f32.mxu0 0.0
  %1376 = vmatmul.mubr.f32.gmra.mrb[0].mxu0 %v1198
  %v1377 = vpop.f32.mrb[0].mxu0
  %v1378 = vadd.f32 0.0, %v1377
  %v1379 = vpop.f32.mrb[0].mxu0
  %v1380 = vadd.f32 0.0, %v1379
  %1381 = vmatprep.mubr.f32.mxu0 0.0
  %1382 = vmatmul.mubr.f32.gmra.mrb[0].mxu0 %v1201
  %v1383 = vpop.f32.mrb[0].mxu0
  %v1384 = vadd.f32 0.0, %v1383
  %v1385 = vpop.f32.mrb[0].mxu0
  %v1386 = vadd.f32 0.0, %v1385
  %1387 = vmatprep.mubr.f32.mxu0 0.0
  %1388 = vmatmul.mubr.f32.gmra.mrb[0].mxu0 %v1204
  %v1389 = vpop.f32.mrb[0].mxu0
  %v1390 = vadd.f32 0.0, %v1389
  %v1391 = vpop.f32.mrb[0].mxu0
  %v1392 = vadd.f32 0.0, %v1391
  %1393 = vmatprep.mubr.f32.mxu0 0.0
  %1394 = vmatmul.mubr.f32.gmra.mrb[0].mxu0 %v1207
  %v1395 = vpop.f32.mrb[0].mxu0
  %v1396 = vadd.f32 0.0, %v1395
  %v1397 = vpop.f32.mrb[0].mxu0
  %v1398 = vadd.f32 0.0, %v1397
  %1399 = vmatprep.mubr.f32.mxu0 0.0
  %1400 = vmatmul.mubr.f32.gmra.mrb[0].mxu0 %v1210
  %v1401 = vpop.f32.mrb[0].mxu0
  %v1402 = vadd.f32 0.0, %v1401
  %v1403 = vpop.f32.mrb[0].mxu0
  %v1404 = vadd.f32 0.0, %v1403
  %1405 = vmatprep.mubr.f32.mxu0 0.0
  %1406 = vmatmul.mubr.f32.gmra.mrb[0].mxu0 %v1213
  %v1407 = vpop.f32.mrb[0].mxu0
  %v1408 = vadd.f32 0.0, %v1407
  %v1409 = vpop.f32.mrb[0].mxu0
  %v1410 = vadd.f32 0.0, %v1409
  %1411 = vmatprep.mubr.f32.mxu0 0.0
  %1412 = vmatmul.mubr.f32.gmra.mrb[0].mxu0 %v1216
  %v1413 = vpop.f32.mrb[0].mxu0
  %v1414 = vadd.f32 0.0, %v1413
  %v1415 = vpop.f32.mrb[0].mxu0
  %v1416 = vadd.f32 0.0, %v1415
  %1417 = vmatprep.mubr.f32.mxu0 0.0
  %1418 = vmatmul.mubr.f32.gmra.mrb[0].mxu0 %v1219
  %v1419 = vpop.f32.mrb[0].mxu0
  %v1420 = vadd.f32 0.0, %v1419
  %v1421 = vpop.f32.mrb[0].mxu0
  %v1422 = vadd.f32 0.0, %v1421
  %1423 = vmatprep.mubr.f32.mxu0 0.0
  %1424 = vmatmul.mubr.f32.gmra.mrb[0].mxu0 %v1222
  %v1425 = vpop.f32.mrb[0].mxu0
  %v1426 = vadd.f32 0.0, %v1425
  %v1427 = vpop.f32.mrb[0].mxu0
  %v1428 = vadd.f32 0.0, %v1427
  %1429 = vmatprep.mubr.f32.mxu0 0.0
  %1430 = vmatmul.mubr.f32.gmra.mrb[0].mxu0 %v1225
  %v1431 = vpop.f32.mrb[0].mxu0
  %v1432 = vadd.f32 0.0, %v1431
  %v1433 = vpop.f32.mrb[0].mxu0
  %v1434 = vadd.f32 0.0, %v1433
  %1435 = vmatprep.mubr.f32.mxu0 0.0
  %1436 = vmatmul.mubr.f32.gmra.mrb[0].mxu0 %v1228
  %v1437 = vpop.f32.mrb[0].mxu0
  %v1438 = vadd.f32 0.0, %v1437
  %v1439 = vpop.f32.mrb[0].mxu0
  %v1440 = vadd.f32 0.0, %v1439
  %1441 = vmatprep.mubr.f32.mxu0 0.0
  %1442 = vmatmul.mubr.f32.gmra.mrb[0].mxu0 %v1231
  %v1443 = vpop.f32.mrb[0].mxu0
  %v1444 = vadd.f32 0.0, %v1443
  %v1445 = vpop.f32.mrb[0].mxu0
  %v1446 = vadd.f32 0.0, %v1445
  %1447 = vmatprep.mubr.f32.mxu0 0.0
  %1448 = vmatmul.mubr.f32.gmra.mrb[0].mxu0 %v1234
  %v1449 = vpop.f32.mrb[0].mxu0
  %v1450 = vadd.f32 0.0, %v1449
  %v1451 = vpop.f32.mrb[0].mxu0
  %v1452 = vadd.f32 0.0, %v1451
  %1453 = vmatprep.mubr.f32.mxu0 0.0
  %1454 = vmatmul.mubr.f32.gmra.mrb[0].mxu0 %v1237
  %v1455 = vpop.f32.mrb[0].mxu0
  %v1456 = vadd.f32 0.0, %v1455
  %v1457 = vpop.f32.mrb[0].mxu0
  %v1458 = vadd.f32 0.0, %v1457
  %1459 = vmatprep.mubr.f32.mxu0 0.0
  %1460 = vmatmul.mubr.f32.gmra.mrb[0].mxu0 %v1240
  %v1461 = vpop.f32.mrb[0].mxu0
  %v1462 = vadd.f32 0.0, %v1461
  %v1463 = vpop.f32.mrb[0].mxu0
  %v1464 = vadd.f32 0.0, %v1463
  %1465 = vmatprep.mubr.f32.mxu0 0.0
  %1466 = vmatmul.mubr.f32.gmra.mrb[0].mxu0 %v1243
  %v1467 = vpop.f32.mrb[0].mxu0
  %v1468 = vadd.f32 0.0, %v1467
  %v1469 = vpop.f32.mrb[0].mxu0
  %v1470 = vadd.f32 0.0, %v1469
  %1471 = vmatprep.mubr.f32.mxu0 0.0
  %1472 = vmatmul.mubr.f32.gmra.mrb[0].mxu0 %v1246
  %v1473 = vpop.f32.mrb[0].mxu0
  %v1474 = vadd.f32 0.0, %v1473
  %v1475 = vpop.f32.mrb[0].mxu0
  %v1476 = vadd.f32 0.0, %v1475
  %1477 = vmatprep.mubr.f32.mxu0 0.0
  %1478 = vmatmul.mubr.f32.gmra.mrb[0].mxu0 %v1249
  %v1479 = vpop.f32.mrb[0].mxu0
  %v1480 = vadd.f32 0.0, %v1479
  %v1481 = vpop.f32.mrb[0].mxu0
  %v1482 = vadd.f32 0.0, %v1481
  %1483 = vmatprep.mubr.f32.mxu0 0.0
  %1484 = vmatmul.mubr.f32.gmra.mrb[0].mxu0 %v1252
  %v1485 = vpop.f32.mrb[0].mxu0
  %v1486 = vadd.f32 0.0, %v1485
  %v1487 = vpop.f32.mrb[0].mxu0
  %v1488 = vadd.f32 0.0, %v1487
  %1489 = vmatprep.mubr.f32.mxu0 0.0
  %1490 = vmatmul.mubr.f32.gmra.mrb[0].mxu0 %v1255
  %v1491 = vpop.f32.mrb[0].mxu0
  %v1492 = vadd.f32 0.0, %v1491
  %v1493 = vpop.f32.mrb[0].mxu0
  %v1494 = vadd.f32 0.0, %v1493
  %1495 = vmatprep.mubr.f32.mxu0 0.0
  %1496 = vmatmul.mubr.f32.gmra.mrb[0].mxu0 %v1258
  %v1497 = vpop.f32.mrb[0].mxu0
  %v1498 = vadd.f32 0.0, %v1497
  %v1499 = vpop.f32.mrb[0].mxu0
  %v1500 = vadd.f32 0.0, %v1499
  %1501 = vmatprep.mubr.f32.mxu0 0.0
  %1502 = vmatmul.mubr.f32.gmra.mrb[0].mxu0 %v1261
  %v1503 = vpop.f32.mrb[0].mxu0
  %v1504 = vadd.f32 0.0, %v1503
  %v1505 = vpop.f32.mrb[0].mxu0
  %v1506 = vadd.f32 0.0, %v1505
  %1507 = vmatprep.mubr.f32.mxu0 0.0
  %1508 = vmatmul.mubr.f32.gmra.mrb[0].mxu0 %v1264
  %v1509 = vpop.f32.mrb[0].mxu0
  %v1510 = vadd.f32 0.0, %v1509
  %v1511 = vpop.f32.mrb[0].mxu0
  %v1512 = vadd.f32 0.0, %v1511
  %1513 = vmatprep.mubr.f32.mxu0 0.0
  %1514 = vmatmul.mubr.f32.gmra.mrb[0].mxu0 %v1267
  %v1515 = vpop.f32.mrb[0].mxu0
  %v1516 = vadd.f32 0.0, %v1515
  %v1517 = vpop.f32.mrb[0].mxu0
  %v1518 = vadd.f32 0.0, %v1517
  %1519 = vmatprep.mubr.f32.mxu0 0.0
  %1520 = vmatmul.mubr.f32.gmra.mrb[0].mxu0 %v1270
  %v1521 = vpop.f32.mrb[0].mxu0
  %v1522 = vadd.f32 0.0, %v1521
  %v1523 = vpop.f32.mrb[0].mxu0
  %v1524 = vadd.f32 0.0, %v1523
  %1525 = vmatprep.mubr.f32.mxu0 0.0
  %1526 = vmatmul.mubr.f32.gmra.mrb[0].mxu0 %v1273
  %v1527 = vpop.f32.mrb[0].mxu0
  %v1528 = vadd.f32 0.0, %v1527
  %v1529 = vpop.f32.mrb[0].mxu0
  %v1530 = vadd.f32 0.0, %v1529
  %1531 = vdwg.mxu0
  %v1532 = vmax.f32 %v1342, %v1354
  %v1533 = vmax.f32 %v1348, %v1360
  %v1534 = vmax.f32 %v1532, %v1366
  %v1535 = vmax.f32 %v1533, %v1372
  %v1536 = vmax.f32 %v1534, %v1378
  %v1537 = vmax.f32 %v1535, %v1384
  %v1538 = vmax.f32 %v1536, %v1390
  %v1539 = vmax.f32 %v1537, %v1396
  %v1540 = vmax.f32 %v1538, %v1402
  %v1541 = vmax.f32 %v1539, %v1408
  %v1542 = vmax.f32 %v1540, %v1414
  %v1543 = vmax.f32 %v1541, %v1420
  %v1544 = vmax.f32 %v1542, %v1426
  %v1545 = vmax.f32 %v1543, %v1432
  %v1546 = vmax.f32 %v1544, %v1438
  %v1547 = vmax.f32 %v1545, %v1444
  %v1548 = vmax.f32 %v1546, %v1450
  %v1549 = vmax.f32 %v1547, %v1456
  %v1550 = vmax.f32 %v1548, %v1462
  %v1551 = vmax.f32 %v1549, %v1468
  %v1552 = vmax.f32 %v1550, %v1474
  %v1553 = vmax.f32 %v1551, %v1480
  %v1554 = vmax.f32 %v1552, %v1486
  %v1555 = vmax.f32 %v1553, %v1492
  %v1556 = vmax.f32 %v1554, %v1498
  %v1557 = vmax.f32 %v1555, %v1504
  %v1558 = vmax.f32 %v1556, %v1510
  %v1559 = vmax.f32 %v1557, %v1516
  %v1560 = vmax.f32 %v1558, %v1522
  %v1561 = vmax.f32 %v1559, %v1528
  %v1562 = vmax.f32 %v1560, %v1561
  %v1563 = vrot.slane %v1562, 4
  %v1564 = vmax.f32 %v1562, %v1563
  %v1565 = vrot.slane %v1564, 2
  %v1566 = vmax.f32 %v1564, %v1565
  %v1567 = vrot.slane %v1566, 1
  %v1568 = vmax.f32 %v1566, %v1567
  %v1569 = vmax.f32 %v1344, %v1356
  %v1570 = vmax.f32 %v1350, %v1362
  %v1571 = vmax.f32 %v1569, %v1368
  %v1572 = vmax.f32 %v1570, %v1374
  %v1573 = vmax.f32 %v1571, %v1380
  %v1574 = vmax.f32 %v1572, %v1386
  %v1575 = vmax.f32 %v1573, %v1392
  %v1576 = vmax.f32 %v1574, %v1398
  %v1577 = vmax.f32 %v1575, %v1404
  %v1578 = vmax.f32 %v1576, %v1410
  %v1579 = vmax.f32 %v1577, %v1416
  %v1580 = vmax.f32 %v1578, %v1422
  %v1581 = vmax.f32 %v1579, %v1428
  %v1582 = vmax.f32 %v1580, %v1434
  %v1583 = vmax.f32 %v1581, %v1440
  %v1584 = vmax.f32 %v1582, %v1446
  %v1585 = vmax.f32 %v1583, %v1452
  %v1586 = vmax.f32 %v1584, %v1458
  %v1587 = vmax.f32 %v1585, %v1464
  %v1588 = vmax.f32 %v1586, %v1470
  %v1589 = vmax.f32 %v1587, %v1476
  %v1590 = vmax.f32 %v1588, %v1482
  %v1591 = vmax.f32 %v1589, %v1488
  %v1592 = vmax.f32 %v1590, %v1494
  %v1593 = vmax.f32 %v1591, %v1500
  %v1594 = vmax.f32 %v1592, %v1506
  %v1595 = vmax.f32 %v1593, %v1512
  %v1596 = vmax.f32 %v1594, %v1518
  %v1597 = vmax.f32 %v1595, %v1524
  %v1598 = vmax.f32 %v1596, %v1530
  %v1599 = vmax.f32 %v1597, %v1598
  %v1600 = vrot.slane %v1599, 4
  %v1601 = vmax.f32 %v1599, %v1600
  %v1602 = vrot.slane %v1601, 2
  %v1603 = vmax.f32 %v1601, %v1602
  %v1604 = vrot.slane %v1603, 1
  %v1605 = vmax.f32 %v1603, %v1604
  %v1606 = vsub.f32 %v1342, %v1568
  %v1607 = vsub.f32 %v1344, %v1605
  %v1608 = vsub.f32 %v1348, %v1568
  %v1609 = vsub.f32 %v1350, %v1605
  %v1610 = vsub.f32 %v1354, %v1568
  %v1611 = vsub.f32 %v1356, %v1605
  %v1612 = vsub.f32 %v1360, %v1568
  %v1613 = vsub.f32 %v1362, %v1605
  %v1614 = vsub.f32 %v1366, %v1568
  %v1615 = vsub.f32 %v1368, %v1605
  %v1616 = vsub.f32 %v1372, %v1568
  %v1617 = vsub.f32 %v1374, %v1605
  %v1618 = vsub.f32 %v1378, %v1568
  %v1619 = vsub.f32 %v1380, %v1605
  %v1620 = vsub.f32 %v1384, %v1568
  %v1621 = vsub.f32 %v1386, %v1605
  %v1622 = vsub.f32 %v1390, %v1568
  %v1623 = vsub.f32 %v1392, %v1605
  %v1624 = vsub.f32 %v1396, %v1568
  %v1625 = vsub.f32 %v1398, %v1605
  %v1626 = vsub.f32 %v1402, %v1568
  %v1627 = vsub.f32 %v1404, %v1605
  %v1628 = vsub.f32 %v1408, %v1568
  %v1629 = vsub.f32 %v1410, %v1605
  %v1630 = vsub.f32 %v1414, %v1568
  %v1631 = vsub.f32 %v1416, %v1605
  %v1632 = vsub.f32 %v1420, %v1568
  %v1633 = vsub.f32 %v1422, %v1605
  %v1634 = vsub.f32 %v1426, %v1568
  %v1635 = vsub.f32 %v1428, %v1605
  %v1636 = vsub.f32 %v1432, %v1568
  %v1637 = vsub.f32 %v1434, %v1605
  %v1638 = vsub.f32 %v1438, %v1568
  %v1639 = vsub.f32 %v1440, %v1605
  %v1640 = vsub.f32 %v1444, %v1568
  %v1641 = vsub.f32 %v1446, %v1605
  %v1642 = vsub.f32 %v1450, %v1568
  %v1643 = vsub.f32 %v1452, %v1605
  %v1644 = vsub.f32 %v1456, %v1568
  %v1645 = vsub.f32 %v1458, %v1605
  %v1646 = vsub.f32 %v1462, %v1568
  %v1647 = vsub.f32 %v1464, %v1605
  %v1648 = vsub.f32 %v1468, %v1568
  %v1649 = vsub.f32 %v1470, %v1605
  %v1650 = vsub.f32 %v1474, %v1568
  %v1651 = vsub.f32 %v1476, %v1605
  %v1652 = vsub.f32 %v1480, %v1568
  %v1653 = vsub.f32 %v1482, %v1605
  %v1654 = vsub.f32 %v1486, %v1568
  %v1655 = vsub.f32 %v1488, %v1605
  %v1656 = vsub.f32 %v1492, %v1568
  %v1657 = vsub.f32 %v1494, %v1605
  %v1658 = vsub.f32 %v1498, %v1568
  %v1659 = vsub.f32 %v1500, %v1605
  %v1660 = vsub.f32 %v1504, %v1568
  %v1661 = vsub.f32 %v1506, %v1605
  %v1662 = vsub.f32 %v1510, %v1568
  %v1663 = vsub.f32 %v1512, %v1605
  %v1664 = vsub.f32 %v1516, %v1568
  %v1665 = vsub.f32 %v1518, %v1605
  %v1666 = vsub.f32 %v1522, %v1568
  %v1667 = vsub.f32 %v1524, %v1605
  %v1668 = vsub.f32 %v1528, %v1568
  %v1669 = vsub.f32 %v1530, %v1605
  %v1670 = vmul.f32 %v1606, 1.442695
  %v1671 = vpow.pop %v1670
  %v1672 = vmul.f32 %v1607, 1.442695
  %v1673 = vpow.pop %v1672
  %v1674 = vmul.f32 %v1608, 1.442695
  %v1675 = vpow.pop %v1674
  %v1676 = vmul.f32 %v1609, 1.442695
  %v1677 = vpow.pop %v1676
  %v1678 = vmul.f32 %v1610, 1.442695
  %v1679 = vpow.pop %v1678
  %v1680 = vmul.f32 %v1611, 1.442695
  %v1681 = vpow.pop %v1680
  %v1682 = vmul.f32 %v1612, 1.442695
  %v1683 = vpow.pop %v1682
  %v1684 = vmul.f32 %v1613, 1.442695
  %v1685 = vpow.pop %v1684
  %v1686 = vmul.f32 %v1614, 1.442695
  %v1687 = vpow.pop %v1686
  %v1688 = vmul.f32 %v1615, 1.442695
  %v1689 = vpow.pop %v1688
  %v1690 = vmul.f32 %v1616, 1.442695
  %v1691 = vpow.pop %v1690
  %v1692 = vmul.f32 %v1617, 1.442695
  %v1693 = vpow.pop %v1692
  %v1694 = vmul.f32 %v1618, 1.442695
  %v1695 = vpow.pop %v1694
  %v1696 = vmul.f32 %v1619, 1.442695
  %v1697 = vpow.pop %v1696
  %v1698 = vmul.f32 %v1620, 1.442695
  %v1699 = vpow.pop %v1698
  %v1700 = vmul.f32 %v1621, 1.442695
  %v1701 = vpow.pop %v1700
  %v1702 = vmul.f32 %v1622, 1.442695
  %v1703 = vpow.pop %v1702
  %v1704 = vmul.f32 %v1623, 1.442695
  %v1705 = vpow.pop %v1704
  %v1706 = vmul.f32 %v1624, 1.442695
  %v1707 = vpow.pop %v1706
  %v1708 = vmul.f32 %v1625, 1.442695
  %v1709 = vpow.pop %v1708
  %v1710 = vmul.f32 %v1626, 1.442695
  %v1711 = vpow.pop %v1710
  %v1712 = vmul.f32 %v1627, 1.442695
  %v1713 = vpow.pop %v1712
  %v1714 = vmul.f32 %v1628, 1.442695
  %v1715 = vpow.pop %v1714
  %v1716 = vmul.f32 %v1629, 1.442695
  %v1717 = vpow.pop %v1716
  %v1718 = vmul.f32 %v1630, 1.442695
  %v1719 = vpow.pop %v1718
  %v1720 = vmul.f32 %v1631, 1.442695
  %v1721 = vpow.pop %v1720
  %v1722 = vmul.f32 %v1632, 1.442695
  %v1723 = vpow.pop %v1722
  %v1724 = vmul.f32 %v1633, 1.442695
  %v1725 = vpow.pop %v1724
  %v1726 = vmul.f32 %v1634, 1.442695
  %v1727 = vpow.pop %v1726
  %v1728 = vmul.f32 %v1635, 1.442695
  %v1729 = vpow.pop %v1728
  %v1730 = vmul.f32 %v1636, 1.442695
  %v1731 = vpow.pop %v1730
  %v1732 = vmul.f32 %v1637, 1.442695
  %v1733 = vpow.pop %v1732
  %v1734 = vmul.f32 %v1638, 1.442695
  %v1735 = vpow.pop %v1734
  %v1736 = vmul.f32 %v1639, 1.442695
  %v1737 = vpow.pop %v1736
  %v1738 = vmul.f32 %v1640, 1.442695
  %v1739 = vpow.pop %v1738
  %v1740 = vmul.f32 %v1641, 1.442695
  %v1741 = vpow.pop %v1740
  %v1742 = vmul.f32 %v1642, 1.442695
  %v1743 = vpow.pop %v1742
  %v1744 = vmul.f32 %v1643, 1.442695
  %v1745 = vpow.pop %v1744
  %v1746 = vmul.f32 %v1644, 1.442695
  %v1747 = vpow.pop %v1746
  %v1748 = vmul.f32 %v1645, 1.442695
  %v1749 = vpow.pop %v1748
  %v1750 = vmul.f32 %v1646, 1.442695
  %v1751 = vpow.pop %v1750
  %v1752 = vmul.f32 %v1647, 1.442695
  %v1753 = vpow.pop %v1752
  %v1754 = vmul.f32 %v1648, 1.442695
  %v1755 = vpow.pop %v1754
  %v1756 = vmul.f32 %v1649, 1.442695
  %v1757 = vpow.pop %v1756
  %v1758 = vmul.f32 %v1650, 1.442695
  %v1759 = vpow.pop %v1758
  %v1760 = vmul.f32 %v1651, 1.442695
  %v1761 = vpow.pop %v1760
  %v1762 = vmul.f32 %v1652, 1.442695
  %v1763 = vpow.pop %v1762
  %v1764 = vmul.f32 %v1653, 1.442695
  %v1765 = vpow.pop %v1764
  %v1766 = vmul.f32 %v1654, 1.442695
  %v1767 = vpow.pop %v1766
  %v1768 = vmul.f32 %v1655, 1.442695
  %v1769 = vpow.pop %v1768
  %v1770 = vmul.f32 %v1656, 1.442695
  %v1771 = vpow.pop %v1770
  %v1772 = vmul.f32 %v1657, 1.442695
  %v1773 = vpow.pop %v1772
  %v1774 = vmul.f32 %v1658, 1.442695
  %v1775 = vpow.pop %v1774
  %v1776 = vmul.f32 %v1659, 1.442695
  %v1777 = vpow.pop %v1776
  %v1778 = vmul.f32 %v1660, 1.442695
  %v1779 = vpow.pop %v1778
  %v1780 = vmul.f32 %v1661, 1.442695
  %v1781 = vpow.pop %v1780
  %v1782 = vmul.f32 %v1662, 1.442695
  %v1783 = vpow.pop %v1782
  %v1784 = vmul.f32 %v1663, 1.442695
  %v1785 = vpow.pop %v1784
  %v1786 = vmul.f32 %v1664, 1.442695
  %v1787 = vpow.pop %v1786
  %v1788 = vmul.f32 %v1665, 1.442695
  %v1789 = vpow.pop %v1788
  %v1790 = vmul.f32 %v1666, 1.442695
  %v1791 = vpow.pop %v1790
  %v1792 = vmul.f32 %v1667, 1.442695
  %v1793 = vpow.pop %v1792
  %v1794 = vmul.f32 %v1668, 1.442695
  %v1795 = vpow.pop %v1794
  %v1796 = vmul.f32 %v1669, 1.442695
  %v1797 = vpow.pop %v1796
  %v1798 = vpack.c.bf16 %v1675, %v1671
  %v1799 = vpack.c.bf16 %v1677, %v1673
  %v1800 = vpack.c.bf16 %v1683, %v1679
  %v1801 = vpack.c.bf16 %v1685, %v1681
  %v1802 = vpack.c.bf16 %v1691, %v1687
  %v1803 = vpack.c.bf16 %v1693, %v1689
  %v1804 = vpack.c.bf16 %v1699, %v1695
  %v1805 = vpack.c.bf16 %v1701, %v1697
  %v1806 = vpack.c.bf16 %v1707, %v1703
  %v1807 = vpack.c.bf16 %v1709, %v1705
  %v1808 = vpack.c.bf16 %v1715, %v1711
  %v1809 = vpack.c.bf16 %v1717, %v1713
  %v1810 = vpack.c.bf16 %v1723, %v1719
  %v1811 = vpack.c.bf16 %v1725, %v1721
  %v1812 = vpack.c.bf16 %v1731, %v1727
  %v1813 = vpack.c.bf16 %v1733, %v1729
  %v1814 = vpack.c.bf16 %v1739, %v1735
  %v1815 = vpack.c.bf16 %v1741, %v1737
  %v1816 = vpack.c.bf16 %v1747, %v1743
  %v1817 = vpack.c.bf16 %v1749, %v1745
  %v1818 = vpack.c.bf16 %v1755, %v1751
  %v1819 = vpack.c.bf16 %v1757, %v1753
  %v1820 = vpack.c.bf16 %v1763, %v1759
  %v1821 = vpack.c.bf16 %v1765, %v1761
  %v1822 = vpack.c.bf16 %v1771, %v1767
  %v1823 = vpack.c.bf16 %v1773, %v1769
  %v1824 = vpack.c.bf16 %v1779, %v1775
  %v1825 = vpack.c.bf16 %v1781, %v1777
  %v1826 = vpack.c.bf16 %v1787, %v1783
  %v1827 = vpack.c.bf16 %v1789, %v1785
  %v1828 = vpack.c.bf16 %v1795, %v1791
  %v1829 = vpack.c.bf16 %v1797, %v1793
  %v1830 = vpack.c.bf16 %v1093, %v1087
  %v1831 = vpack.c.bf16 %v1095, %v1089
  %v1832 = vpack.c.bf16 %v1099, %v1099
  %v1833 = vpack.c.bf16 %v1101, %v1101
  %1834 = vmatprep.subr.bf16.mxu0 %v1799
  %1835 = vmatpush1.bf16.msra.mxu0 %v1798
  %1836 = vmatprep.subr.bf16.mxu0 %v1801
  %1837 = vmatpush1.bf16.msra.mxu0 %v1800
  %1838 = vmatprep.subr.bf16.mxu0 %v1803
  %1839 = vmatpush1.bf16.msra.mxu0 %v1802
  %1840 = vmatprep.subr.bf16.mxu0 %v1805
  %1841 = vmatpush1.bf16.msra.mxu0 %v1804
  %1842 = vmatprep.subr.bf16.mxu0 %v1807
  %1843 = vmatpush1.bf16.msra.mxu0 %v1806
  %1844 = vmatprep.subr.bf16.mxu0 %v1809
  %1845 = vmatpush1.bf16.msra.mxu0 %v1808
  %1846 = vmatprep.subr.bf16.mxu0 %v1811
  %1847 = vmatpush1.bf16.msra.mxu0 %v1810
  %1848 = vmatprep.subr.bf16.mxu0 %v1813
  %1849 = vmatpush1.bf16.msra.mxu0 %v1812
  %1850 = vmatprep.subr.bf16.mxu0 %v1815
  %1851 = vmatpush1.bf16.msra.mxu0 %v1814
  %1852 = vmatprep.subr.bf16.mxu0 %v1817
  %1853 = vmatpush1.bf16.msra.mxu0 %v1816
  %1854 = vmatprep.subr.bf16.mxu0 %v1819
  %1855 = vmatpush1.bf16.msra.mxu0 %v1818
  %1856 = vmatprep.subr.bf16.mxu0 %v1821
  %1857 = vmatpush1.bf16.msra.mxu0 %v1820
  %1858 = vmatprep.subr.bf16.mxu0 %v1823
  %1859 = vmatpush1.bf16.msra.mxu0 %v1822
  %1860 = vmatprep.subr.bf16.mxu0 %v1825
  %1861 = vmatpush1.bf16.msra.mxu0 %v1824
  %1862 = vmatprep.subr.bf16.mxu0 %v1827
  %1863 = vmatpush1.bf16.msra.mxu0 %v1826
  %1864 = vmatprep.subr.bf16.mxu0 %v1829
  %1865 = vmatpush1.bf16.msra.mxu0 %v1828
  %1866 = vmatprep.mubr.bf16.mxu0 %v1831
  %1867 = vmatmul.mubr.bf16.gmra.mrb[0].mxu0 %v1830
  %v1868 = vpop.f32.mrb[0].mxu0
  %v1869 = vadd.f32 0.0, %v1868
  %v1870 = vpop.f32.mrb[0].mxu0
  %v1871 = vadd.f32 0.0, %v1870
  %v1872 = vpop.f32.mrb[0].mxu0
  %v1873 = vadd.f32 0.0, %v1872
  %v1874 = vpop.f32.mrb[0].mxu0
  %v1875 = vadd.f32 0.0, %v1874
  %1876 = vmatprep.mubr.bf16.mxu0 %v1833
  %1877 = vmatmul.mubr.bf16.gmra.mrb[0].mxu0 %v1832
  %v1878 = vpop.f32.mrb[0].mxu0
  %v1879 = vadd.f32 0.0, %v1878
  %v1880 = vpop.f32.mrb[0].mxu0
  %v1881 = vadd.f32 0.0, %v1880
  %v1882 = vpop.f32.mrb[0].mxu0
  %v1883 = vpop.f32.mrb[0].mxu0
  %1884 = vdwg.mxu0
  %v1885 = vrcp.pop %v1879
  %v1886 = vrcp.pop %v1881
  %v1887 = vmul.f32 %v942, %v1885
  %v1888 = vmul.f32 %v942, %v1886
  %v1889 = vlaneseq
  %v1890 = vshrl.u32 %v1889, 7
  %v1891 = vsub.s32 0, %v1890
  %v1892 = vrot.slane %v1887, %v1891
  %v1893 = vlaneseq
  %v1894 = vshrl.u32 %v1893, 7
  %v1895 = vsub.s32 0, %v1894
  %v1896 = vrot.slane %v1888, %v1895
  %v1897 = vmul.f32 %v1869, %v1892
  %v1898 = vmul.f32 %v1871, %v1896
  %v1899 = vmul.f32 %v1873, %v1892
  %v1900 = vmul.f32 %v1875, %v1896
  %v1901 = vadd.f32 %v1897, %v966
  %v1902 = vadd.f32 %v1898, %v967
  %v1903 = vadd.f32 %v1899, %v968
  %v1904 = vadd.f32 %v1900, %v969
  %s1905 = scalar_lea.vmem %s4, 32
  %1906 = vst [vmem:[%s1905] sm:$0xff] %v1901
  %1907 = vst [vmem:[%s1905 + $0x8] sm:$0xff] %v1902
  %1908 = vst [vmem:[%s1905 + $0x10] sm:$0xff] %v1903
  %1909 = vst [vmem:[%s1905 + $0x18] sm:$0xff] %v1904
  // Predicated region
  $region18: #{_self_attention_2d_impl.1} parent=0 // pred_check
    _
  $region19: #{_self_attention_2d_impl.1} parent=0 // pred_check_branch
    %1911 = sbr.rel (0) target = $region21
  $region20: #{_self_attention_2d_impl.1} parent=0 // pred_region
    _
  $region21: #{_self_attention_2d_impl.1} parent=0 // pred_fallthru
    _
  // Predicated region
  $region22: #{_self_attention_2d_impl.1} parent=0 // pred_check
    _
  $region23: #{_self_attention_2d_impl.1} parent=0 // pred_check_branch
    %1913 = sbr.rel (0) target = $region25
  $region24: #{_self_attention_2d_impl.1} parent=0 // pred_region
    _
  $region25: #{_self_attention_2d_impl.1} parent=0 // pred_fallthru
    _

</llo_original>
